<compile_context>
chip_gen: v7x
topology: tpu7x:2x2x1
jax: 0.10.0
libtpu: 0.0.40
codegen_flags: <defaults>
</compile_context>

<pallas_src>
import functools

import jax
import jax.numpy as jnp
from jax.experimental import pallas as pl
from jax.experimental.pallas import tpu as pltpu

OBS_DIM = 24      # BipedalWalker-v3 observation_space.shape = (24,)
ACT_DIM = 4       # BipedalWalker-v3 action_space.shape = (4,)
FC1_DIMS = 1024
FC2_DIMS = 512
STD_INIT = 0.5
LOG_STD_MIN = -20.0
LOG_STD_MAX = 2.0


def _round_up(n, m):
    return -(-n // m) * m


def actor_kernel(x_ref, w1_ref, b1_ref, w2_ref, b2_ref, w3_ref, b3_ref, mu_ref):
    # fc1 + relu  (bf16 operands on the MXU, f32 accumulate; biases kept f32)
    x = x_ref[...].astype(jnp.bfloat16)
    h1 = jnp.dot(x, w1_ref[...], preferred_element_type=jnp.float32) + b1_ref[...]
    h1 = jnp.maximum(h1, 0.0).astype(jnp.bfloat16)

    # fc2 + relu  (binding matmul: K=1024, N=512)
    h2 = jnp.dot(h1, w2_ref[...], preferred_element_type=jnp.float32) + b2_ref[...]
    h2 = jnp.maximum(h2, 0.0).astype(jnp.bfloat16)

    # fc3 + tanh -> mu, stored directly as the narrow (tb, ACT_DIM) output
    mu = jnp.tanh(jnp.dot(h2, w3_ref[...], preferred_element_type=jnp.float32) + b3_ref[...])
    mu_ref[...] = mu.astype(mu_ref.dtype)


def prepare_params(params):
    """One-time prep (re-run after every parameter update):
    bf16 weights + precomputed std row (std would otherwise go stale)."""
    w1, b1, w2, b2, w3, b3, log_std = params
    std = jnp.exp(jnp.clip(log_std, LOG_STD_MIN, LOG_STD_MAX))   # (1, ACT_DIM)
    return (w1.astype(jnp.bfloat16), b1,
            w2.astype(jnp.bfloat16), b2,
            w3.astype(jnp.bfloat16), b3,
            std)


@functools.partial(jax.jit, static_argnames=("tile_b",))
def actor_forward(x, prep, tile_b=512):
    """x: (B, 24) float32. Returns (mu, std), each (B, 4) float32."""
    w1, b1, w2, b2, w3, b3, std = prep
    B = x.shape[0]

    # Balanced batch tiling (multiples of 8 sublanes), >=2 grid points when B >= 16 so
    # the "parallel" grid axis can shard across v7x's two TensorCores.
    b8 = _round_up(max(B, 8), 8)
    n_tiles = -(-b8 // tile_b)
    if b8 >= 16:
        n_tiles = max(n_tiles, 2)
    tb = _round_up(-(-b8 // n_tiles), 8)
    b_pad = tb * n_tiles
    if b_pad != B:
        x = jnp.pad(x, ((0, b_pad - B), (0, 0)))
    grid = (n_tiles,)

    flops = 2 * b_pad * (OBS_DIM * FC1_DIMS + FC1_DIMS * FC2_DIMS + FC2_DIMS * ACT_DIM)
    transcendentals = b_pad * ACT_DIM  # tanh
    bytes_accessed = (
        2 * (OBS_DIM * FC1_DIMS + FC1_DIMS * FC2_DIMS + FC2_DIMS * ACT_DIM)  # bf16 weights
        + 4 * (FC1_DIMS + FC2_DIMS + ACT_DIM)                                # f32 biases
        + 4 * b_pad * (OBS_DIM + ACT_DIM)                                    # x in, mu out
    )

    mu_pad = pl.pallas_call(
        actor_kernel,
        out_shape=jax.ShapeDtypeStruct((b_pad, ACT_DIM), jnp.float32),
        grid=grid,
        in_specs=[
            pl.BlockSpec((tb, OBS_DIM), lambda i: (i, 0)),          # x tile
            pl.BlockSpec((OBS_DIM, FC1_DIMS), lambda i: (0, 0)),    # w1 (VMEM-resident)
            pl.BlockSpec((1, FC1_DIMS), lambda i: (0, 0)),          # b1
            pl.BlockSpec((FC1_DIMS, FC2_DIMS), lambda i: (0, 0)),   # w2 (VMEM-resident)
            pl.BlockSpec((1, FC2_DIMS), lambda i: (0, 0)),          # b2
            pl.BlockSpec((FC2_DIMS, ACT_DIM), lambda i: (0, 0)),    # w3 (VMEM-resident)
            pl.BlockSpec((1, ACT_DIM), lambda i: (0, 0)),           # b3
        ],
        out_specs=pl.BlockSpec((tb, ACT_DIM), lambda i: (i, 0)),
        compiler_params=pltpu.CompilerParams(
            dimension_semantics=("parallel",),
            vmem_limit_bytes=32 * 1024 * 1024,
        ),
        cost_estimate=pl.CostEstimate(flops=flops, transcendentals=transcendentals,
                                      bytes_accessed=bytes_accessed),
    )(x, w1, b1, w2, b2, w3, b3)

    mu = mu_pad[:B]
    std_full = jnp.broadcast_to(std, mu.shape).astype(jnp.float32)
    return mu, std_full


def init_params(key):
    """Deterministic init mirroring nn.Linear defaults: U(-1/sqrt(fan_in), 1/sqrt(fan_in))."""
    def linear(k, fan_in, fan_out):
        kw, kb = jax.random.split(k)
        bound = 1.0 / jnp.sqrt(jnp.float32(fan_in))
        w = jax.random.uniform(kw, (fan_in, fan_out), jnp.float32, -bound, bound)
        b = jax.random.uniform(kb, (1, fan_out), jnp.float32, -bound, bound)
        return w, b

    k1, k2, k3 = jax.random.split(key, 3)
    w1, b1 = linear(k1, OBS_DIM, FC1_DIMS)
    w2, b2 = linear(k2, FC1_DIMS, FC2_DIMS)
    w3, b3 = linear(k3, FC2_DIMS, ACT_DIM)
    log_std = jnp.ones((1, ACT_DIM), jnp.float32) * STD_INIT
    return (w1, b1, w2, b2, w3, b3, log_std)


def reference_forward(x, params):
    """Plain-JAX reference with the same numerics as the kernel (bf16 weights, f32 acc)."""
    w1, b1, w2, b2, w3, b3, log_std = params
    xb = x.astype(jnp.bfloat16)
    h1 = jnp.maximum(
        jnp.dot(xb, w1.astype(jnp.bfloat16), preferred_element_type=jnp.float32) + b1, 0.0)
    h2 = jnp.maximum(
        jnp.dot(h1.astype(jnp.bfloat16), w2.astype(jnp.bfloat16),
                preferred_element_type=jnp.float32) + b2, 0.0)
    mu = jnp.tanh(
        jnp.dot(h2.astype(jnp.bfloat16), w3.astype(jnp.bfloat16),
                preferred_element_type=jnp.float32) + b3)
    std = jnp.broadcast_to(jnp.exp(jnp.clip(log_std, LOG_STD_MIN, LOG_STD_MAX)), mu.shape)
    return mu, std


def reference_forward_f32(x, params):
    """Full-f32 reference (matches the PyTorch module's numerics)."""
    w1, b1, w2, b2, w3, b3, log_std = params
    h1 = jnp.maximum(x @ w1 + b1, 0.0)
    h2 = jnp.maximum(h1 @ w2 + b2, 0.0)
    mu = jnp.tanh(h2 @ w3 + b3)
    std = jnp.broadcast_to(jnp.exp(jnp.clip(log_std, LOG_STD_MIN, LOG_STD_MAX)), mu.shape)
    return mu, std


if __name__ == "__main__":
    key = jax.random.PRNGKey(0)
    kp, kx = jax.random.split(key)
    params = init_params(kp)
    prep = prepare_params(params)

    # Small batch (single grid step, batch padded to 8 sublanes internally).
    B = 4
    x = jax.random.normal(kx, (B, OBS_DIM), jnp.float32)
    mu, std = actor_forward(x, prep)
    jax.block_until_ready((mu, std))

    mu_ref, std_ref = reference_forward(x, params)
    assert mu.shape == (B, ACT_DIM) and std.shape == (B, ACT_DIM)
    assert jnp.allclose(mu, mu_ref, atol=1e-3, rtol=1e-3), "mu mismatch (small batch)"
    assert jnp.allclose(std, std_ref, atol=1e-6, rtol=1e-6), "std mismatch (small batch)"
    # Documented bf16-vs-f32 gap (~1e-2 typical); loose sanity bound vs the f32 reference.
    mu_f32, _ = reference_forward_f32(x, params)
    assert jnp.allclose(mu, mu_f32, atol=0.1), "mu far from f32 reference"

    # Awkward batch size: exercises balanced tiling (2 tiles of 152 -> pad to 304, not 512)
    # and the >=2 grid-point path with VMEM-resident weights.
    B2 = 300
    x2 = jax.random.normal(jax.random.PRNGKey(1), (B2, OBS_DIM), jnp.float32)
    mu2, std2 = actor_forward(x2, prep)
    jax.block_until_ready((mu2, std2))
    mu2_ref, std2_ref = reference_forward(x2, params)
    assert mu2.shape == (B2, ACT_DIM) and std2.shape == (B2, ACT_DIM)
    assert jnp.allclose(mu2, mu2_ref, atol=1e-3, rtol=1e-3), "mu mismatch (tiled batch)"
    assert jnp.allclose(std2, std2_ref, atol=1e-6, rtol=1e-6), "std mismatch (tiled batch)"

    print("KERNEL_OK")
</pallas_src>

<mosaic_0001>
module attributes {stable_mosaic.version = 11 : i64} {
  func.func @actor_kernel(%arg0: i32, %arg1: memref<8x24xf32, #tpu.memory_space<vmem>>, %arg2: memref<24x1024xbf16, #tpu.memory_space<vmem>>, %arg3: memref<1x1024xf32, #tpu.memory_space<vmem>>, %arg4: memref<1024x512xbf16, #tpu.memory_space<vmem>>, %arg5: memref<1x512xf32, #tpu.memory_space<vmem>>, %arg6: memref<512x4xbf16, #tpu.memory_space<vmem>>, %arg7: memref<1x4xf32, #tpu.memory_space<vmem>>, %arg8: memref<8x4xf32, #tpu.memory_space<vmem>>) attributes {dimension_semantics = [#tpu.dimension_semantics<parallel>], iteration_bounds = array<i64: 1>, scalar_prefetch = 0 : i64, scratch_operands = 0 : i64, tpu.core_type = #tpu.core_type<tc>, window_params = [{transform_indices = @transform_0, window_bounds = array<i64: 8, 24>}, {pipeline_mode = #tpu.pipeline_mode<synchronous>, transform_indices = @transform_1, window_bounds = array<i64: 24, 1024>}, {pipeline_mode = #tpu.pipeline_mode<synchronous>, transform_indices = @transform_2, window_bounds = array<i64: 1, 1024>}, {pipeline_mode = #tpu.pipeline_mode<synchronous>, transform_indices = @transform_3, window_bounds = array<i64: 1024, 512>}, {pipeline_mode = #tpu.pipeline_mode<synchronous>, transform_indices = @transform_4, window_bounds = array<i64: 1, 512>}, {pipeline_mode = #tpu.pipeline_mode<synchronous>, transform_indices = @transform_5, window_bounds = array<i64: 512, 4>}, {pipeline_mode = #tpu.pipeline_mode<synchronous>, transform_indices = @transform_6, window_bounds = array<i64: 1, 4>}, {transform_indices = @transform_7, window_bounds = array<i64: 8, 4>}]} {
    %c0 = arith.constant 0 : index
    %c0_0 = arith.constant 0 : index
    %0 = vector.load %arg1[%c0, %c0_0] : memref<8x24xf32, #tpu.memory_space<vmem>>, vector<8x24xf32>
    %1 = arith.truncf %0 : vector<8x24xf32> to vector<8x24xbf16>
    %c0_1 = arith.constant 0 : index
    %c0_2 = arith.constant 0 : index
    %2 = vector.load %arg2[%c0_1, %c0_2] : memref<24x1024xbf16, #tpu.memory_space<vmem>>, vector<24x1024xbf16>
    %cst = arith.constant dense<0.000000e+00> : vector<8x1024xf32>
    %3 = tpu.matmul %1, %2, %cst {dimension_numbers = #tpu.dot_dimension_numbers<[1], [0], [0], [1], [0, 0, 1, 1], [], []>} : vector<8x24xbf16>, vector<24x1024xbf16>, vector<8x1024xf32> -> vector<8x1024xf32>
    %c0_3 = arith.constant 0 : index
    %c0_4 = arith.constant 0 : index
    %4 = vector.load %arg3[%c0_3, %c0_4] : memref<1x1024xf32, #tpu.memory_space<vmem>>, vector<1x1024xf32>
    %5 = vector.broadcast %4 : vector<1x1024xf32> to vector<8x1024xf32>
    %6 = arith.addf %3, %5 : vector<8x1024xf32>
    %cst_5 = arith.constant 0.000000e+00 : f32
    %7 = vector.broadcast %cst_5 : f32 to vector<8x1024xf32>
    %8 = arith.maximumf %6, %7 : vector<8x1024xf32>
    %9 = arith.truncf %8 : vector<8x1024xf32> to vector<8x1024xbf16>
    %c0_6 = arith.constant 0 : index
    %c0_7 = arith.constant 0 : index
    %10 = vector.load %arg4[%c0_6, %c0_7] : memref<1024x512xbf16, #tpu.memory_space<vmem>>, vector<1024x512xbf16>
    %cst_8 = arith.constant dense<0.000000e+00> : vector<8x512xf32>
    %11 = tpu.matmul %9, %10, %cst_8 {dimension_numbers = #tpu.dot_dimension_numbers<[1], [0], [0], [1], [0, 0, 1, 1], [], []>} : vector<8x1024xbf16>, vector<1024x512xbf16>, vector<8x512xf32> -> vector<8x512xf32>
    %c0_9 = arith.constant 0 : index
    %c0_10 = arith.constant 0 : index
    %12 = vector.load %arg5[%c0_9, %c0_10] : memref<1x512xf32, #tpu.memory_space<vmem>>, vector<1x512xf32>
    %13 = vector.broadcast %12 : vector<1x512xf32> to vector<8x512xf32>
    %14 = arith.addf %11, %13 : vector<8x512xf32>
    %cst_11 = arith.constant 0.000000e+00 : f32
    %15 = vector.broadcast %cst_11 : f32 to vector<8x512xf32>
    %16 = arith.maximumf %14, %15 : vector<8x512xf32>
    %17 = arith.truncf %16 : vector<8x512xf32> to vector<8x512xbf16>
    %c0_12 = arith.constant 0 : index
    %c0_13 = arith.constant 0 : index
    %18 = vector.load %arg6[%c0_12, %c0_13] : memref<512x4xbf16, #tpu.memory_space<vmem>>, vector<512x4xbf16>
    %cst_14 = arith.constant dense<0.000000e+00> : vector<8x4xf32>
    %19 = tpu.matmul %17, %18, %cst_14 {dimension_numbers = #tpu.dot_dimension_numbers<[1], [0], [0], [1], [0, 0, 1, 1], [], []>} : vector<8x512xbf16>, vector<512x4xbf16>, vector<8x4xf32> -> vector<8x4xf32>
    %c0_15 = arith.constant 0 : index
    %c0_16 = arith.constant 0 : index
    %20 = vector.load %arg7[%c0_15, %c0_16] : memref<1x4xf32, #tpu.memory_space<vmem>>, vector<1x4xf32>
    %21 = vector.broadcast %20 : vector<1x4xf32> to vector<8x4xf32>
    %22 = arith.addf %19, %21 : vector<8x4xf32>
    %23 = math.tanh %22 : vector<8x4xf32>
    %c0_17 = arith.constant 0 : index
    %c0_18 = arith.constant 0 : index
    %24 = vector.load %arg8[%c0_17, %c0_18] : memref<8x4xf32, #tpu.memory_space<vmem>>, vector<8x4xf32>
    tpu.vector_store %arg8[%c0_17, %c0_18], %23 {strides = array<i32>} : memref<8x4xf32, #tpu.memory_space<vmem>>, vector<8x4xf32>,
    return
  }
  func.func @transform_0(%arg0: i32) -> (i32, i32) {
    %c0_i32 = arith.constant 0 : i32
    %c0_i32_0 = arith.constant 0 : i32
    return %arg0, %c0_i32 : i32, i32
  }
  func.func @transform_1(%arg0: i32) -> (i32, i32) {
    %c0_i32 = arith.constant 0 : i32
    %c0_i32_0 = arith.constant 0 : i32
    %c0_i32_1 = arith.constant 0 : i32
    return %c0_i32, %c0_i32_0 : i32, i32
  }
  func.func @transform_2(%arg0: i32) -> (i32, i32) {
    %c0_i32 = arith.constant 0 : i32
    %c0_i32_0 = arith.constant 0 : i32
    %c0_i32_1 = arith.constant 0 : i32
    return %c0_i32, %c0_i32_0 : i32, i32
  }
  func.func @transform_3(%arg0: i32) -> (i32, i32) {
    %c0_i32 = arith.constant 0 : i32
    %c0_i32_0 = arith.constant 0 : i32
    %c0_i32_1 = arith.constant 0 : i32
    return %c0_i32, %c0_i32_0 : i32, i32
  }
  func.func @transform_4(%arg0: i32) -> (i32, i32) {
    %c0_i32 = arith.constant 0 : i32
    %c0_i32_0 = arith.constant 0 : i32
    %c0_i32_1 = arith.constant 0 : i32
    return %c0_i32, %c0_i32_0 : i32, i32
  }
  func.func @transform_5(%arg0: i32) -> (i32, i32) {
    %c0_i32 = arith.constant 0 : i32
    %c0_i32_0 = arith.constant 0 : i32
    %c0_i32_1 = arith.constant 0 : i32
    return %c0_i32, %c0_i32_0 : i32, i32
  }
  func.func @transform_6(%arg0: i32) -> (i32, i32) {
    %c0_i32 = arith.constant 0 : i32
    %c0_i32_0 = arith.constant 0 : i32
    %c0_i32_1 = arith.constant 0 : i32
    return %c0_i32, %c0_i32_0 : i32, i32
  }
  func.func @transform_7(%arg0: i32) -> (i32, i32) {
    %c0_i32 = arith.constant 0 : i32
    %c0_i32_0 = arith.constant 0 : i32
    return %arg0, %c0_i32 : i32, i32
  }
}

</mosaic_0001>

<llo_original>
// kernel: actor_forward.1
$region0: #{actor_forward.1}
  #allocation0 [shape = 'u32[]', space=smem, size = 0x4, offset = 0x4, fixed_abs, tag = 'smem constant byte address 0x4 - core index']
  #allocation1 [shape = 'u32[144,128]{1,0:T(1,128)}', space=vmem, size = 0x12000, scoped, tag = 'internal scratch']
  %s0 = inlined_call_operand.vmem [shape: f32[8,24], index: 0, kind: input, shape index: {}]
  %s1 = inlined_call_operand.vmem [shape: bf16[24,1024], index: 1, kind: input, shape index: {}]
  %s2 = inlined_call_operand.vmem [shape: f32[1,1024], index: 2, kind: input, shape index: {}]
  %s3 = inlined_call_operand.hbm [shape: bf16[1024,512], index: 3, kind: input, shape index: {}]
  %s4 = inlined_call_operand.vmem [shape: f32[1,512], index: 4, kind: input, shape index: {}]
  %s5 = inlined_call_operand.vmem [shape: bf16[512,4], index: 5, kind: input, shape index: {}]
  %s6 = inlined_call_operand.vmem [shape: f32[1,4], index: 6, kind: input, shape index: {}]
  %s7 = inlined_call_operand.vmem [shape: f32[8,4], index: 7, kind: output, shape index: {}]
  %s8 = sld [smem:[#allocation0]]
  $region42: #{actor_forward.1} parent=0
    _
  %s10 = ssub.s32 1, %s8
  %s11 = scalar_select 0, %s10, %s8
  $region1: #{actor_forward.1} parent=0
    #allocation2 [shape = 'u8[1048576]{0}', space=vmem, size = 0x100000, scoped, tag = 'input window, operand 3, single buffered']
    #allocation3 [shape = 's32[1]{0}', space=sflag, size = 0x4, scoped, tag = 'scoped memory for actor_forward.1']
    %12 = vsyncpa [#allocation3], 0
    // Predicated region
    $region2: #{actor_forward.1} parent=1 // pred_check
      _
    $region3: #{actor_forward.1} parent=1 // pred_check_branch
      %14 = sbr.rel (0) target = $region5
    $region4: #{actor_forward.1} parent=1 // pred_region
      _
    $region5: #{actor_forward.1} parent=1 // pred_fallthru
      _
    // Predicated region
    $region6: #{actor_forward.1} parent=1 // pred_check
      _
    $region7: #{actor_forward.1} parent=1 // pred_check_branch
      %16 = sbr.rel (0) target = $region9
    $region8: #{actor_forward.1} parent=1 // pred_region
      _
    $region9: #{actor_forward.1} parent=1 // pred_fallthru
      _
    // Predicated region
    $region10: #{actor_forward.1} parent=1 // pred_check
      _
    $region11: #{actor_forward.1} parent=1 // pred_check_branch
      %18 = sbr.rel (0) target = $region13
    $region12: #{actor_forward.1} parent=1 // pred_region
      _
    $region13: #{actor_forward.1} parent=1 // pred_fallthru
      _
    // Predicated region
    $region14: #{actor_forward.1} parent=1 // pred_check
      _
    $region15: #{actor_forward.1} parent=1 // pred_check_branch
      %20 = sbr.rel (0) target = $region17
    $region16: #{actor_forward.1} parent=1 // pred_region
      %s22 = ssub.s32 32768, 32768
      %23 = vsyncadd [#allocation3], %s22
      %s24 = sshll.u32 [#allocation2], 4
      %s25 = int_to_ptr.vmem [resolvable:$true] %s24
      %30 = dma.hbm_to_vmem [thread:$0]  %s3, 32768, %s25, [#allocation3], 256, 256, 16
    $region17: #{actor_forward.1} parent=1 // pred_fallthru
      _
    // Predicated region
    $region18: #{actor_forward.1} parent=1 // pred_check
      _
    $region19: #{actor_forward.1} parent=1 // pred_check_branch
      %32 = sbr.rel (0) target = $region21
    $region20: #{actor_forward.1} parent=1 // pred_region
      _
    $region21: #{actor_forward.1} parent=1 // pred_fallthru
      _
    // Predicated region
    $region22: #{actor_forward.1} parent=1 // pred_check
      _
    $region23: #{actor_forward.1} parent=1 // pred_check_branch
      %34 = sbr.rel (0) target = $region25
    $region24: #{actor_forward.1} parent=1 // pred_region
      _
    $region25: #{actor_forward.1} parent=1 // pred_fallthru
      _
    // Predicated region
    $region26: #{actor_forward.1} parent=1 // pred_check
      _
    $region27: #{actor_forward.1} parent=1 // pred_check_branch
      %36 = sbr.rel (0) target = $region29
    $region28: #{actor_forward.1} parent=1 // pred_region
      _
    $region29: #{actor_forward.1} parent=1 // pred_fallthru
      _
    // Predicated region
    $region30: #{actor_forward.1} parent=1 // pred_check
      _
    $region31: #{actor_forward.1} parent=1 // pred_check_branch
      %38 = sbr.rel (0) target = $region33
    $region32: #{actor_forward.1} parent=1 // pred_region
      %39 = dma.done [#allocation3], 32768
    $region33: #{actor_forward.1} parent=1 // pred_fallthru
      _
    %v41 = vld [vmem:[%s0] sm:$0xff]
    %v42 = vpack.c.bf16 %v41, %v41
    %v43 = vld [vmem:[%s1] sm:$0xff]
    %v44 = vld [vmem:[%s1 + $0x8] sm:$0xff]
    %v45 = vld [vmem:[%s1 + $0x10] sm:$0xff]
    %v46 = vld [vmem:[%s1 + $0x18] sm:$0xff]
    %v47 = vld [vmem:[%s1 + $0x20] sm:$0xff]
    %v48 = vld [vmem:[%s1 + $0x28] sm:$0xff]
    %v49 = vld [vmem:[%s1 + $0x30] sm:$0xff]
    %v50 = vld [vmem:[%s1 + $0x38] sm:$0xff]
    %v51 = vld [vmem:[%s1 + $0x40] sm:$0xff]
    %v52 = vld [vmem:[%s1 + $0x48] sm:$0xff]
    %v53 = vld [vmem:[%s1 + $0x50] sm:$0xff]
    %v54 = vld [vmem:[%s1 + $0x58] sm:$0xff]
    %v55 = vld [vmem:[%s2] sm:$0xff]
    %v57 = vlaneseq
    %v58 = vshrl.u32 %v57, 7
    %v59 = vsub.s32 0, %v58
    %v60 = vrot.slane %v55, %v59
    %v61 = vlaneseq
    %v62 = vshrl.u32 %v61, 7
    %v63 = vsub.s32 1, %v62
    %v64 = vrot.slane %v55, %v63
    %v65 = vlaneseq
    %v66 = vshrl.u32 %v65, 7
    %v67 = vsub.s32 2, %v66
    %v68 = vrot.slane %v55, %v67
    %v69 = vlaneseq
    %v70 = vshrl.u32 %v69, 7
    %v71 = vsub.s32 3, %v70
    %v72 = vrot.slane %v55, %v71
    %v73 = vlaneseq
    %v74 = vshrl.u32 %v73, 7
    %v75 = vsub.s32 4, %v74
    %v76 = vrot.slane %v55, %v75
    %v77 = vlaneseq
    %v78 = vshrl.u32 %v77, 7
    %v79 = vsub.s32 5, %v78
    %v80 = vrot.slane %v55, %v79
    %v81 = vlaneseq
    %v82 = vshrl.u32 %v81, 7
    %v83 = vsub.s32 6, %v82
    %v84 = vrot.slane %v55, %v83
    %v85 = vlaneseq
    %v86 = vshrl.u32 %v85, 7
    %v87 = vsub.s32 7, %v86
    %v88 = vrot.slane %v55, %v87
    %v109 = vunpack.c.l.b16 %v43
    %v110 = vunpack.c.h.b16 %v43
    %v111 = vunpack.c.l.b16 %v44
    %v112 = vunpack.c.h.b16 %v44
    %v113 = vunpack.c.l.b16 %v45
    %v114 = vunpack.c.h.b16 %v45
    %v115 = vunpack.c.l.b16 %v46
    %v116 = vunpack.c.h.b16 %v46
    %v117 = vunpack.c.l.b16 %v47
    %v118 = vunpack.c.h.b16 %v47
    %v119 = vunpack.c.l.b16 %v48
    %v120 = vunpack.c.h.b16 %v48
    %v121 = vunpack.c.l.b16 %v49
    %v122 = vunpack.c.h.b16 %v49
    %v123 = vunpack.c.l.b16 %v50
    %v124 = vunpack.c.h.b16 %v50
    %v125 = vunpack.c.l.b16 %v51
    %v126 = vunpack.c.h.b16 %v51
    %v127 = vunpack.c.l.b16 %v52
    %v128 = vunpack.c.h.b16 %v52
    %v129 = vunpack.c.l.b16 %v53
    %v130 = vunpack.c.h.b16 %v53
    %v131 = vunpack.c.l.b16 %v54
    %v132 = vunpack.c.h.b16 %v54
    %v133 = vpack.c.b16 %v117, %v109
    %v134 = vpack.c.b16 %v118, %v110
    %v135 = vpack.c.b16 %v119, %v111
    %v136 = vpack.c.b16 %v120, %v112
    %v137 = vpack.c.b16 %v121, %v113
    %v138 = vpack.c.b16 %v122, %v114
    %v139 = vpack.c.b16 %v123, %v115
    %v140 = vpack.c.b16 %v124, %v116
    %v141 = vpack.c.b16 %v125, %v125
    %v142 = vpack.c.b16 %v126, %v126
    %v143 = vpack.c.b16 %v127, %v127
    %v144 = vpack.c.b16 %v128, %v128
    %v145 = vpack.c.b16 %v129, %v129
    %v146 = vpack.c.b16 %v130, %v130
    %v147 = vpack.c.b16 %v131, %v131
    %v148 = vpack.c.b16 %v132, %v132
    %vm157 = vcmask 195584
    %v159 = vsel %vm157, %v42, 0
    %vm161 = vcmask 1043456
    %v163 = vsel %vm161, %v141, 0
    %v166 = vsel %vm161, %v142, 0
    %v169 = vsel %vm161, %v143, 0
    %v172 = vsel %vm161, %v144, 0
    %v175 = vsel %vm161, %v145, 0
    %v178 = vsel %vm161, %v146, 0
    %v181 = vsel %vm161, %v147, 0
    %v184 = vsel %vm161, %v148, 0
    %186 = vmatprep.subr.bf16.mxu0 %v134
    %187 = vmatpush1.bf16.msra.mxu0 %v133
    %188 = vmatprep.subr.bf16.mxu0 %v166
    %189 = vmatpush1.bf16.msra.mxu0 %v163
    %190 = vmatprep.subr.bf16.mxu0 0
    %191 = vmatpush1.bf16.msra.mxu0 0
    %192 = vmatprep.subr.bf16.mxu0 0
    %193 = vmatpush1.bf16.msra.mxu0 0
    %194 = vmatprep.subr.bf16.mxu0 0
    %195 = vmatpush1.bf16.msra.mxu0 0
    %196 = vmatprep.subr.bf16.mxu0 0
    %197 = vmatpush1.bf16.msra.mxu0 0
    %198 = vmatprep.subr.bf16.mxu0 0
    %199 = vmatpush1.bf16.msra.mxu0 0
    %200 = vmatprep.subr.bf16.mxu0 0
    %201 = vmatpush1.bf16.msra.mxu0 0
    %202 = vmatprep.subr.bf16.mxu0 0
    %203 = vmatpush1.bf16.msra.mxu0 0
    %204 = vmatprep.subr.bf16.mxu0 0
    %205 = vmatpush1.bf16.msra.mxu0 0
    %206 = vmatprep.subr.bf16.mxu0 0
    %207 = vmatpush1.bf16.msra.mxu0 0
    %208 = vmatprep.subr.bf16.mxu0 0
    %209 = vmatpush1.bf16.msra.mxu0 0
    %210 = vmatprep.subr.bf16.mxu0 0
    %211 = vmatpush1.bf16.msra.mxu0 0
    %212 = vmatprep.subr.bf16.mxu0 0
    %213 = vmatpush1.bf16.msra.mxu0 0
    %214 = vmatprep.subr.bf16.mxu0 0
    %215 = vmatpush1.bf16.msra.mxu0 0
    %216 = vmatprep.subr.bf16.mxu0 0
    %217 = vmatpush1.bf16.msra.mxu0 0
    %218 = vmatprep.mubr.bf16.mxu0 0
    %219 = vmatmul.mubr.bf16.gmra.mrb[0].mxu0 %v159
    %v220 = vpop.f32.mrb[0].mxu0
    %v221 = vadd.f32 %v60, %v220
    %v222 = vpop.f32.mrb[0].mxu0
    %v223 = vadd.f32 %v64, %v222
    %v224 = vpop.f32.mrb[0].mxu0
    %v225 = vpop.f32.mrb[0].mxu0
    %226 = vdwg.mxu0
    %227 = vmatprep.subr.bf16.mxu0 %v136
    %228 = vmatpush1.bf16.msra.mxu0 %v135
    %229 = vmatprep.subr.bf16.mxu0 %v172
    %230 = vmatpush1.bf16.msra.mxu0 %v169
    %231 = vmatprep.subr.bf16.mxu0 0
    %232 = vmatpush1.bf16.msra.mxu0 0
    %233 = vmatprep.subr.bf16.mxu0 0
    %234 = vmatpush1.bf16.msra.mxu0 0
    %235 = vmatprep.subr.bf16.mxu0 0
    %236 = vmatpush1.bf16.msra.mxu0 0
    %237 = vmatprep.subr.bf16.mxu0 0
    %238 = vmatpush1.bf16.msra.mxu0 0
    %239 = vmatprep.subr.bf16.mxu0 0
    %240 = vmatpush1.bf16.msra.mxu0 0
    %241 = vmatprep.subr.bf16.mxu0 0
    %242 = vmatpush1.bf16.msra.mxu0 0
    %243 = vmatprep.subr.bf16.mxu0 0
    %244 = vmatpush1.bf16.msra.mxu0 0
    %245 = vmatprep.subr.bf16.mxu0 0
    %246 = vmatpush1.bf16.msra.mxu0 0
    %247 = vmatprep.subr.bf16.mxu0 0
    %248 = vmatpush1.bf16.msra.mxu0 0
    %249 = vmatprep.subr.bf16.mxu0 0
    %250 = vmatpush1.bf16.msra.mxu0 0
    %251 = vmatprep.subr.bf16.mxu0 0
    %252 = vmatpush1.bf16.msra.mxu0 0
    %253 = vmatprep.subr.bf16.mxu0 0
    %254 = vmatpush1.bf16.msra.mxu0 0
    %255 = vmatprep.subr.bf16.mxu0 0
    %256 = vmatpush1.bf16.msra.mxu0 0
    %257 = vmatprep.subr.bf16.mxu0 0
    %258 = vmatpush1.bf16.msra.mxu0 0
    %259 = vmatprep.mubr.bf16.mxu0 0
    %260 = vmatmul.mubr.bf16.gmra.mrb[0].mxu0 %v159
    %v261 = vpop.f32.mrb[0].mxu0
    %v262 = vadd.f32 %v68, %v261
    %v263 = vpop.f32.mrb[0].mxu0
    %v264 = vadd.f32 %v72, %v263
    %v265 = vpop.f32.mrb[0].mxu0
    %v266 = vpop.f32.mrb[0].mxu0
    %267 = vdwg.mxu0
    %268 = vmatprep.subr.bf16.mxu0 %v138
    %269 = vmatpush1.bf16.msra.mxu0 %v137
    %270 = vmatprep.subr.bf16.mxu0 %v178
    %271 = vmatpush1.bf16.msra.mxu0 %v175
    %272 = vmatprep.subr.bf16.mxu0 0
    %273 = vmatpush1.bf16.msra.mxu0 0
    %274 = vmatprep.subr.bf16.mxu0 0
    %275 = vmatpush1.bf16.msra.mxu0 0
    %276 = vmatprep.subr.bf16.mxu0 0
    %277 = vmatpush1.bf16.msra.mxu0 0
    %278 = vmatprep.subr.bf16.mxu0 0
    %279 = vmatpush1.bf16.msra.mxu0 0
    %280 = vmatprep.subr.bf16.mxu0 0
    %281 = vmatpush1.bf16.msra.mxu0 0
    %282 = vmatprep.subr.bf16.mxu0 0
    %283 = vmatpush1.bf16.msra.mxu0 0
    %284 = vmatprep.subr.bf16.mxu0 0
    %285 = vmatpush1.bf16.msra.mxu0 0
    %286 = vmatprep.subr.bf16.mxu0 0
    %287 = vmatpush1.bf16.msra.mxu0 0
    %288 = vmatprep.subr.bf16.mxu0 0
    %289 = vmatpush1.bf16.msra.mxu0 0
    %290 = vmatprep.subr.bf16.mxu0 0
    %291 = vmatpush1.bf16.msra.mxu0 0
    %292 = vmatprep.subr.bf16.mxu0 0
    %293 = vmatpush1.bf16.msra.mxu0 0
    %294 = vmatprep.subr.bf16.mxu0 0
    %295 = vmatpush1.bf16.msra.mxu0 0
    %296 = vmatprep.subr.bf16.mxu0 0
    %297 = vmatpush1.bf16.msra.mxu0 0
    %298 = vmatprep.subr.bf16.mxu0 0
    %299 = vmatpush1.bf16.msra.mxu0 0
    %300 = vmatprep.mubr.bf16.mxu0 0
    %301 = vmatmul.mubr.bf16.gmra.mrb[0].mxu0 %v159
    %v302 = vpop.f32.mrb[0].mxu0
    %v303 = vadd.f32 %v76, %v302
    %v304 = vpop.f32.mrb[0].mxu0
    %v305 = vadd.f32 %v80, %v304
    %v306 = vpop.f32.mrb[0].mxu0
    %v307 = vpop.f32.mrb[0].mxu0
    %308 = vdwg.mxu0
    %309 = vmatprep.subr.bf16.mxu0 %v140
    %310 = vmatpush1.bf16.msra.mxu0 %v139
    %311 = vmatprep.subr.bf16.mxu0 %v184
    %312 = vmatpush1.bf16.msra.mxu0 %v181
    %313 = vmatprep.subr.bf16.mxu0 0
    %314 = vmatpush1.bf16.msra.mxu0 0
    %315 = vmatprep.subr.bf16.mxu0 0
    %316 = vmatpush1.bf16.msra.mxu0 0
    %317 = vmatprep.subr.bf16.mxu0 0
    %318 = vmatpush1.bf16.msra.mxu0 0
    %319 = vmatprep.subr.bf16.mxu0 0
    %320 = vmatpush1.bf16.msra.mxu0 0
    %321 = vmatprep.subr.bf16.mxu0 0
    %322 = vmatpush1.bf16.msra.mxu0 0
    %323 = vmatprep.subr.bf16.mxu0 0
    %324 = vmatpush1.bf16.msra.mxu0 0
    %325 = vmatprep.subr.bf16.mxu0 0
    %326 = vmatpush1.bf16.msra.mxu0 0
    %327 = vmatprep.subr.bf16.mxu0 0
    %328 = vmatpush1.bf16.msra.mxu0 0
    %329 = vmatprep.subr.bf16.mxu0 0
    %330 = vmatpush1.bf16.msra.mxu0 0
    %331 = vmatprep.subr.bf16.mxu0 0
    %332 = vmatpush1.bf16.msra.mxu0 0
    %333 = vmatprep.subr.bf16.mxu0 0
    %334 = vmatpush1.bf16.msra.mxu0 0
    %335 = vmatprep.subr.bf16.mxu0 0
    %336 = vmatpush1.bf16.msra.mxu0 0
    %337 = vmatprep.subr.bf16.mxu0 0
    %338 = vmatpush1.bf16.msra.mxu0 0
    %339 = vmatprep.subr.bf16.mxu0 0
    %340 = vmatpush1.bf16.msra.mxu0 0
    %341 = vmatprep.mubr.bf16.mxu0 0
    %342 = vmatmul.mubr.bf16.gmra.mrb[0].mxu0 %v159
    %v343 = vpop.f32.mrb[0].mxu0
    %v344 = vadd.f32 %v84, %v343
    %v345 = vpop.f32.mrb[0].mxu0
    %v346 = vadd.f32 %v88, %v345
    %v347 = vpop.f32.mrb[0].mxu0
    %v348 = vpop.f32.mrb[0].mxu0
    %349 = vdwg.mxu0
    %v350 = vmax.f32 %v221, 0.0
    %v351 = vmax.f32 %v223, 0.0
    %v352 = vmax.f32 %v262, 0.0
    %v353 = vmax.f32 %v264, 0.0
    %v354 = vmax.f32 %v303, 0.0
    %v355 = vmax.f32 %v305, 0.0
    %v356 = vmax.f32 %v344, 0.0
    %v357 = vmax.f32 %v346, 0.0
    %v358 = vpack.c.bf16 %v350, %v350
    %v359 = vpack.c.bf16 %v351, %v351
    %v360 = vpack.c.bf16 %v352, %v352
    %v361 = vpack.c.bf16 %v353, %v353
    %v362 = vpack.c.bf16 %v354, %v354
    %v363 = vpack.c.bf16 %v355, %v355
    %v364 = vpack.c.bf16 %v356, %v356
    %v365 = vpack.c.bf16 %v357, %v357
    %v366 = vld [vmem:[#allocation2] sm:$0xff]
    %v367 = vld [vmem:[#allocation2 + $0x8] sm:$0xff]
    %v368 = vld [vmem:[#allocation2 + $0x10] sm:$0xff]
    %v369 = vld [vmem:[#allocation2 + $0x18] sm:$0xff]
    %v370 = vld [vmem:[#allocation2 + $0x20] sm:$0xff]
    %v371 = vld [vmem:[#allocation2 + $0x28] sm:$0xff]
    %v372 = vld [vmem:[#allocation2 + $0x30] sm:$0xff]
    %v373 = vld [vmem:[#allocation2 + $0x38] sm:$0xff]
    %v374 = vld [vmem:[#allocation2 + $0x40] sm:$0xff]
    %v375 = vld [vmem:[#allocation2 + $0x48] sm:$0xff]
    %v376 = vld [vmem:[#allocation2 + $0x50] sm:$0xff]
    %v377 = vld [vmem:[#allocation2 + $0x58] sm:$0xff]
    %v378 = vld [vmem:[#allocation2 + $0x60] sm:$0xff]
    %v379 = vld [vmem:[#allocation2 + $0x68] sm:$0xff]
    %v380 = vld [vmem:[#allocation2 + $0x70] sm:$0xff]
    %v381 = vld [vmem:[#allocation2 + $0x78] sm:$0xff]
    %v382 = vld [vmem:[#allocation2 + $0x80] sm:$0xff]
    %v383 = vld [vmem:[#allocation2 + $0x88] sm:$0xff]
    %v384 = vld [vmem:[#allocation2 + $0x90] sm:$0xff]
    %v385 = vld [vmem:[#allocation2 + $0x98] sm:$0xff]
    %v386 = vld [vmem:[#allocation2 + $0xa0] sm:$0xff]
    %v387 = vld [vmem:[#allocation2 + $0xa8] sm:$0xff]
    %v388 = vld [vmem:[#allocation2 + $0xb0] sm:$0xff]
    %v389 = vld [vmem:[#allocation2 + $0xb8] sm:$0xff]
    %v390 = vld [vmem:[#allocation2 + $0xc0] sm:$0xff]
    %v391 = vld [vmem:[#allocation2 + $0xc8] sm:$0xff]
    %v392 = vld [vmem:[#allocation2 + $0xd0] sm:$0xff]
    %v393 = vld [vmem:[#allocation2 + $0xd8] sm:$0xff]
    %v394 = vld [vmem:[#allocation2 + $0xe0] sm:$0xff]
    %v395 = vld [vmem:[#allocation2 + $0xe8] sm:$0xff]
    %v396 = vld [vmem:[#allocation2 + $0xf0] sm:$0xff]
    %v397 = vld [vmem:[#allocation2 + $0xf8] sm:$0xff]
    %v398 = vld [vmem:[#allocation2 + $0x100] sm:$0xff]
    %v399 = vld [vmem:[#allocation2 + $0x108] sm:$0xff]
    %v400 = vld [vmem:[#allocation2 + $0x110] sm:$0xff]
    %v401 = vld [vmem:[#allocation2 + $0x118] sm:$0xff]
    %v402 = vld [vmem:[#allocation2 + $0x120] sm:$0xff]
    %v403 = vld [vmem:[#allocation2 + $0x128] sm:$0xff]
    %v404 = vld [vmem:[#allocation2 + $0x130] sm:$0xff]
    %v405 = vld [vmem:[#allocation2 + $0x138] sm:$0xff]
    %v406 = vld [vmem:[#allocation2 + $0x140] sm:$0xff]
    %v407 = vld [vmem:[#allocation2 + $0x148] sm:$0xff]
    %v408 = vld [vmem:[#allocation2 + $0x150] sm:$0xff]
    %v409 = vld [vmem:[#allocation2 + $0x158] sm:$0xff]
    %v410 = vld [vmem:[#allocation2 + $0x160] sm:$0xff]
    %v411 = vld [vmem:[#allocation2 + $0x168] sm:$0xff]
    %v412 = vld [vmem:[#allocation2 + $0x170] sm:$0xff]
    %v413 = vld [vmem:[#allocation2 + $0x178] sm:$0xff]
    %v414 = vld [vmem:[#allocation2 + $0x180] sm:$0xff]
    %v415 = vld [vmem:[#allocation2 + $0x188] sm:$0xff]
    %v416 = vld [vmem:[#allocation2 + $0x190] sm:$0xff]
    %v417 = vld [vmem:[#allocation2 + $0x198] sm:$0xff]
    %v418 = vld [vmem:[#allocation2 + $0x1a0] sm:$0xff]
    %v419 = vld [vmem:[#allocation2 + $0x1a8] sm:$0xff]
    %v420 = vld [vmem:[#allocation2 + $0x1b0] sm:$0xff]
    %v421 = vld [vmem:[#allocation2 + $0x1b8] sm:$0xff]
    %v422 = vld [vmem:[#allocation2 + $0x1c0] sm:$0xff]
    %v423 = vld [vmem:[#allocation2 + $0x1c8] sm:$0xff]
    %v424 = vld [vmem:[#allocation2 + $0x1d0] sm:$0xff]
    %v425 = vld [vmem:[#allocation2 + $0x1d8] sm:$0xff]
    %v426 = vld [vmem:[#allocation2 + $0x1e0] sm:$0xff]
    %v427 = vld [vmem:[#allocation2 + $0x1e8] sm:$0xff]
    %v428 = vld [vmem:[#allocation2 + $0x1f0] sm:$0xff]
    %v429 = vld [vmem:[#allocation2 + $0x1f8] sm:$0xff]
    %v430 = vld [vmem:[#allocation2 + $0x200] sm:$0xff]
    %v431 = vld [vmem:[#allocation2 + $0x208] sm:$0xff]
    %v432 = vld [vmem:[#allocation2 + $0x210] sm:$0xff]
    %v433 = vld [vmem:[#allocation2 + $0x218] sm:$0xff]
    %v434 = vld [vmem:[#allocation2 + $0x220] sm:$0xff]
    %v435 = vld [vmem:[#allocation2 + $0x228] sm:$0xff]
    %v436 = vld [vmem:[#allocation2 + $0x230] sm:$0xff]
    %v437 = vld [vmem:[#allocation2 + $0x238] sm:$0xff]
    %v438 = vld [vmem:[#allocation2 + $0x240] sm:$0xff]
    %v439 = vld [vmem:[#allocation2 + $0x248] sm:$0xff]
    %v440 = vld [vmem:[#allocation2 + $0x250] sm:$0xff]
    %v441 = vld [vmem:[#allocation2 + $0x258] sm:$0xff]
    %v442 = vld [vmem:[#allocation2 + $0x260] sm:$0xff]
    %v443 = vld [vmem:[#allocation2 + $0x268] sm:$0xff]
    %v444 = vld [vmem:[#allocation2 + $0x270] sm:$0xff]
    %v445 = vld [vmem:[#allocation2 + $0x278] sm:$0xff]
    %v446 = vld [vmem:[#allocation2 + $0x280] sm:$0xff]
    %v447 = vld [vmem:[#allocation2 + $0x288] sm:$0xff]
    %v448 = vld [vmem:[#allocation2 + $0x290] sm:$0xff]
    %v449 = vld [vmem:[#allocation2 + $0x298] sm:$0xff]
    %v450 = vld [vmem:[#allocation2 + $0x2a0] sm:$0xff]
    %v451 = vld [vmem:[#allocation2 + $0x2a8] sm:$0xff]
    %v452 = vld [vmem:[#allocation2 + $0x2b0] sm:$0xff]
    %v453 = vld [vmem:[#allocation2 + $0x2b8] sm:$0xff]
    %v454 = vld [vmem:[#allocation2 + $0x2c0] sm:$0xff]
    %v455 = vld [vmem:[#allocation2 + $0x2c8] sm:$0xff]
    %v456 = vld [vmem:[#allocation2 + $0x2d0] sm:$0xff]
    %v457 = vld [vmem:[#allocation2 + $0x2d8] sm:$0xff]
    %v458 = vld [vmem:[#allocation2 + $0x2e0] sm:$0xff]
    %v459 = vld [vmem:[#allocation2 + $0x2e8] sm:$0xff]
    %v460 = vld [vmem:[#allocation2 + $0x2f0] sm:$0xff]
    %v461 = vld [vmem:[#allocation2 + $0x2f8] sm:$0xff]
    %v462 = vld [vmem:[#allocation2 + $0x300] sm:$0xff]
    %v463 = vld [vmem:[#allocation2 + $0x308] sm:$0xff]
    %v464 = vld [vmem:[#allocation2 + $0x310] sm:$0xff]
    %v465 = vld [vmem:[#allocation2 + $0x318] sm:$0xff]
    %v466 = vld [vmem:[#allocation2 + $0x320] sm:$0xff]
    %v467 = vld [vmem:[#allocation2 + $0x328] sm:$0xff]
    %v468 = vld [vmem:[#allocation2 + $0x330] sm:$0xff]
    %v469 = vld [vmem:[#allocation2 + $0x338] sm:$0xff]
    %v470 = vld [vmem:[#allocation2 + $0x340] sm:$0xff]
    %v471 = vld [vmem:[#allocation2 + $0x348] sm:$0xff]
    %v472 = vld [vmem:[#allocation2 + $0x350] sm:$0xff]
    %v473 = vld [vmem:[#allocation2 + $0x358] sm:$0xff]
    %v474 = vld [vmem:[#allocation2 + $0x360] sm:$0xff]
    %v475 = vld [vmem:[#allocation2 + $0x368] sm:$0xff]
    %v476 = vld [vmem:[#allocation2 + $0x370] sm:$0xff]
    %v477 = vld [vmem:[#allocation2 + $0x378] sm:$0xff]
    %v478 = vld [vmem:[#allocation2 + $0x380] sm:$0xff]
    %v479 = vld [vmem:[#allocation2 + $0x388] sm:$0xff]
    %v480 = vld [vmem:[#allocation2 + $0x390] sm:$0xff]
    %v481 = vld [vmem:[#allocation2 + $0x398] sm:$0xff]
    %v482 = vld [vmem:[#allocation2 + $0x3a0] sm:$0xff]
    %v483 = vld [vmem:[#allocation2 + $0x3a8] sm:$0xff]
    %v484 = vld [vmem:[#allocation2 + $0x3b0] sm:$0xff]
    %v485 = vld [vmem:[#allocation2 + $0x3b8] sm:$0xff]
    %v486 = vld [vmem:[#allocation2 + $0x3c0] sm:$0xff]
    %v487 = vld [vmem:[#allocation2 + $0x3c8] sm:$0xff]
    %v488 = vld [vmem:[#allocation2 + $0x3d0] sm:$0xff]
    %v489 = vld [vmem:[#allocation2 + $0x3d8] sm:$0xff]
    %v490 = vld [vmem:[#allocation2 + $0x3e0] sm:$0xff]
    %v491 = vld [vmem:[#allocation2 + $0x3e8] sm:$0xff]
    %v492 = vld [vmem:[#allocation2 + $0x3f0] sm:$0xff]
    %v493 = vld [vmem:[#allocation2 + $0x3f8] sm:$0xff]
    %v494 = vld [vmem:[#allocation2 + $0x400] sm:$0xff]
    %v495 = vld [vmem:[#allocation2 + $0x408] sm:$0xff]
    %v496 = vld [vmem:[#allocation2 + $0x410] sm:$0xff]
    %v497 = vld [vmem:[#allocation2 + $0x418] sm:$0xff]
    %v498 = vld [vmem:[#allocation2 + $0x420] sm:$0xff]
    %v499 = vld [vmem:[#allocation2 + $0x428] sm:$0xff]
    %v500 = vld [vmem:[#allocation2 + $0x430] sm:$0xff]
    %v501 = vld [vmem:[#allocation2 + $0x438] sm:$0xff]
    %v502 = vld [vmem:[#allocation2 + $0x440] sm:$0xff]
    %v503 = vld [vmem:[#allocation2 + $0x448] sm:$0xff]
    %v504 = vld [vmem:[#allocation2 + $0x450] sm:$0xff]
    %v505 = vld [vmem:[#allocation2 + $0x458] sm:$0xff]
    %v506 = vld [vmem:[#allocation2 + $0x460] sm:$0xff]
    %v507 = vld [vmem:[#allocation2 + $0x468] sm:$0xff]
    %v508 = vld [vmem:[#allocation2 + $0x470] sm:$0xff]
    %v509 = vld [vmem:[#allocation2 + $0x478] sm:$0xff]
    %v510 = vld [vmem:[#allocation2 + $0x480] sm:$0xff]
    %v511 = vld [vmem:[#allocation2 + $0x488] sm:$0xff]
    %v512 = vld [vmem:[#allocation2 + $0x490] sm:$0xff]
    %v513 = vld [vmem:[#allocation2 + $0x498] sm:$0xff]
    %v514 = vld [vmem:[#allocation2 + $0x4a0] sm:$0xff]
    %v515 = vld [vmem:[#allocation2 + $0x4a8] sm:$0xff]
    %v516 = vld [vmem:[#allocation2 + $0x4b0] sm:$0xff]
    %v517 = vld [vmem:[#allocation2 + $0x4b8] sm:$0xff]
    %v518 = vld [vmem:[#allocation2 + $0x4c0] sm:$0xff]
    %v519 = vld [vmem:[#allocation2 + $0x4c8] sm:$0xff]
    %v520 = vld [vmem:[#allocation2 + $0x4d0] sm:$0xff]
    %v521 = vld [vmem:[#allocation2 + $0x4d8] sm:$0xff]
    %v522 = vld [vmem:[#allocation2 + $0x4e0] sm:$0xff]
    %v523 = vld [vmem:[#allocation2 + $0x4e8] sm:$0xff]
    %v524 = vld [vmem:[#allocation2 + $0x4f0] sm:$0xff]
    %v525 = vld [vmem:[#allocation2 + $0x4f8] sm:$0xff]
    %v526 = vld [vmem:[#allocation2 + $0x500] sm:$0xff]
    %v527 = vld [vmem:[#allocation2 + $0x508] sm:$0xff]
    %v528 = vld [vmem:[#allocation2 + $0x510] sm:$0xff]
    %v529 = vld [vmem:[#allocation2 + $0x518] sm:$0xff]
    %v530 = vld [vmem:[#allocation2 + $0x520] sm:$0xff]
    %v531 = vld [vmem:[#allocation2 + $0x528] sm:$0xff]
    %v532 = vld [vmem:[#allocation2 + $0x530] sm:$0xff]
    %v533 = vld [vmem:[#allocation2 + $0x538] sm:$0xff]
    %v534 = vld [vmem:[#allocation2 + $0x540] sm:$0xff]
    %v535 = vld [vmem:[#allocation2 + $0x548] sm:$0xff]
    %v536 = vld [vmem:[#allocation2 + $0x550] sm:$0xff]
    %v537 = vld [vmem:[#allocation2 + $0x558] sm:$0xff]
    %v538 = vld [vmem:[#allocation2 + $0x560] sm:$0xff]
    %v539 = vld [vmem:[#allocation2 + $0x568] sm:$0xff]
    %v540 = vld [vmem:[#allocation2 + $0x570] sm:$0xff]
    %v541 = vld [vmem:[#allocation2 + $0x578] sm:$0xff]
    %v542 = vld [vmem:[#allocation2 + $0x580] sm:$0xff]
    %v543 = vld [vmem:[#allocation2 + $0x588] sm:$0xff]
    %v544 = vld [vmem:[#allocation2 + $0x590] sm:$0xff]
    %v545 = vld [vmem:[#allocation2 + $0x598] sm:$0xff]
    %v546 = vld [vmem:[#allocation2 + $0x5a0] sm:$0xff]
    %v547 = vld [vmem:[#allocation2 + $0x5a8] sm:$0xff]
    %v548 = vld [vmem:[#allocation2 + $0x5b0] sm:$0xff]
    %v549 = vld [vmem:[#allocation2 + $0x5b8] sm:$0xff]
    %v550 = vld [vmem:[#allocation2 + $0x5c0] sm:$0xff]
    %v551 = vld [vmem:[#allocation2 + $0x5c8] sm:$0xff]
    %v552 = vld [vmem:[#allocation2 + $0x5d0] sm:$0xff]
    %v553 = vld [vmem:[#allocation2 + $0x5d8] sm:$0xff]
    %v554 = vld [vmem:[#allocation2 + $0x5e0] sm:$0xff]
    %v555 = vld [vmem:[#allocation2 + $0x5e8] sm:$0xff]
    %v556 = vld [vmem:[#allocation2 + $0x5f0] sm:$0xff]
    %v557 = vld [vmem:[#allocation2 + $0x5f8] sm:$0xff]
    %v558 = vld [vmem:[#allocation2 + $0x600] sm:$0xff]
    %v559 = vld [vmem:[#allocation2 + $0x608] sm:$0xff]
    %v560 = vld [vmem:[#allocation2 + $0x610] sm:$0xff]
    %v561 = vld [vmem:[#allocation2 + $0x618] sm:$0xff]
    %v562 = vld [vmem:[#allocation2 + $0x620] sm:$0xff]
    %v563 = vld [vmem:[#allocation2 + $0x628] sm:$0xff]
    %v564 = vld [vmem:[#allocation2 + $0x630] sm:$0xff]
    %v565 = vld [vmem:[#allocation2 + $0x638] sm:$0xff]
    %v566 = vld [vmem:[#allocation2 + $0x640] sm:$0xff]
    %v567 = vld [vmem:[#allocation2 + $0x648] sm:$0xff]
    %v568 = vld [vmem:[#allocation2 + $0x650] sm:$0xff]
    %v569 = vld [vmem:[#allocation2 + $0x658] sm:$0xff]
    %v570 = vld [vmem:[#allocation2 + $0x660] sm:$0xff]
    %v571 = vld [vmem:[#allocation2 + $0x668] sm:$0xff]
    %v572 = vld [vmem:[#allocation2 + $0x670] sm:$0xff]
    %v573 = vld [vmem:[#allocation2 + $0x678] sm:$0xff]
    %v574 = vld [vmem:[#allocation2 + $0x680] sm:$0xff]
    %v575 = vld [vmem:[#allocation2 + $0x688] sm:$0xff]
    %v576 = vld [vmem:[#allocation2 + $0x690] sm:$0xff]
    %v577 = vld [vmem:[#allocation2 + $0x698] sm:$0xff]
    %v578 = vld [vmem:[#allocation2 + $0x6a0] sm:$0xff]
    %v579 = vld [vmem:[#allocation2 + $0x6a8] sm:$0xff]
    %v580 = vld [vmem:[#allocation2 + $0x6b0] sm:$0xff]
    %v581 = vld [vmem:[#allocation2 + $0x6b8] sm:$0xff]
    %v582 = vld [vmem:[#allocation2 + $0x6c0] sm:$0xff]
    %v583 = vld [vmem:[#allocation2 + $0x6c8] sm:$0xff]
    %v584 = vld [vmem:[#allocation2 + $0x6d0] sm:$0xff]
    %v585 = vld [vmem:[#allocation2 + $0x6d8] sm:$0xff]
    %v586 = vld [vmem:[#allocation2 + $0x6e0] sm:$0xff]
    %v587 = vld [vmem:[#allocation2 + $0x6e8] sm:$0xff]
    %v588 = vld [vmem:[#allocation2 + $0x6f0] sm:$0xff]
    %v589 = vld [vmem:[#allocation2 + $0x6f8] sm:$0xff]
    %v590 = vld [vmem:[#allocation2 + $0x700] sm:$0xff]
    %v591 = vld [vmem:[#allocation2 + $0x708] sm:$0xff]
    %v592 = vld [vmem:[#allocation2 + $0x710] sm:$0xff]
    %v593 = vld [vmem:[#allocation2 + $0x718] sm:$0xff]
    %v594 = vld [vmem:[#allocation2 + $0x720] sm:$0xff]
    %v595 = vld [vmem:[#allocation2 + $0x728] sm:$0xff]
    %v596 = vld [vmem:[#allocation2 + $0x730] sm:$0xff]
    %v597 = vld [vmem:[#allocation2 + $0x738] sm:$0xff]
    %v598 = vld [vmem:[#allocation2 + $0x740] sm:$0xff]
    %v599 = vld [vmem:[#allocation2 + $0x748] sm:$0xff]
    %v600 = vld [vmem:[#allocation2 + $0x750] sm:$0xff]
    %v601 = vld [vmem:[#allocation2 + $0x758] sm:$0xff]
    %v602 = vld [vmem:[#allocation2 + $0x760] sm:$0xff]
    %v603 = vld [vmem:[#allocation2 + $0x768] sm:$0xff]
    %v604 = vld [vmem:[#allocation2 + $0x770] sm:$0xff]
    %v605 = vld [vmem:[#allocation2 + $0x778] sm:$0xff]
    %v606 = vld [vmem:[#allocation2 + $0x780] sm:$0xff]
    %v607 = vld [vmem:[#allocation2 + $0x788] sm:$0xff]
    %v608 = vld [vmem:[#allocation2 + $0x790] sm:$0xff]
    %v609 = vld [vmem:[#allocation2 + $0x798] sm:$0xff]
    %v610 = vld [vmem:[#allocation2 + $0x7a0] sm:$0xff]
    %v611 = vld [vmem:[#allocation2 + $0x7a8] sm:$0xff]
    %v612 = vld [vmem:[#allocation2 + $0x7b0] sm:$0xff]
    %v613 = vld [vmem:[#allocation2 + $0x7b8] sm:$0xff]
    %v614 = vld [vmem:[#allocation2 + $0x7c0] sm:$0xff]
    %v615 = vld [vmem:[#allocation2 + $0x7c8] sm:$0xff]
    %v616 = vld [vmem:[#allocation2 + $0x7d0] sm:$0xff]
    %v617 = vld [vmem:[#allocation2 + $0x7d8] sm:$0xff]
    %v618 = vld [vmem:[#allocation2 + $0x7e0] sm:$0xff]
    %v619 = vld [vmem:[#allocation2 + $0x7e8] sm:$0xff]
    %v620 = vld [vmem:[#allocation2 + $0x7f0] sm:$0xff]
    %v621 = vld [vmem:[#allocation2 + $0x7f8] sm:$0xff]
    %v622 = vld [vmem:[%s4] sm:$0xf]
    %v624 = vlaneseq
    %v625 = vshrl.u32 %v624, 7
    %v626 = vsub.s32 0, %v625
    %v627 = vrot.slane %v622, %v626
    %v628 = vlaneseq
    %v629 = vshrl.u32 %v628, 7
    %v630 = vsub.s32 1, %v629
    %v631 = vrot.slane %v622, %v630
    %v632 = vlaneseq
    %v633 = vshrl.u32 %v632, 7
    %v634 = vsub.s32 2, %v633
    %v635 = vrot.slane %v622, %v634
    %v636 = vlaneseq
    %v637 = vshrl.u32 %v636, 7
    %v638 = vsub.s32 3, %v637
    %v639 = vrot.slane %v622, %v638
    %v900 = vunpack.c.l.b16 %v366
    %v901 = vunpack.c.h.b16 %v366
    %v902 = vunpack.c.l.b16 %v367
    %v903 = vunpack.c.h.b16 %v367
    %v904 = vunpack.c.l.b16 %v368
    %v905 = vunpack.c.h.b16 %v368
    %v906 = vunpack.c.l.b16 %v369
    %v907 = vunpack.c.h.b16 %v369
    %v908 = vunpack.c.l.b16 %v370
    %v909 = vunpack.c.h.b16 %v370
    %v910 = vunpack.c.l.b16 %v371
    %v911 = vunpack.c.h.b16 %v371
    %v912 = vunpack.c.l.b16 %v372
    %v913 = vunpack.c.h.b16 %v372
    %v914 = vunpack.c.l.b16 %v373
    %v915 = vunpack.c.h.b16 %v373
    %v916 = vunpack.c.l.b16 %v374
    %v917 = vunpack.c.h.b16 %v374
    %v918 = vunpack.c.l.b16 %v375
    %v919 = vunpack.c.h.b16 %v375
    %v920 = vunpack.c.l.b16 %v376
    %v921 = vunpack.c.h.b16 %v376
    %v922 = vunpack.c.l.b16 %v377
    %v923 = vunpack.c.h.b16 %v377
    %v924 = vunpack.c.l.b16 %v378
    %v925 = vunpack.c.h.b16 %v378
    %v926 = vunpack.c.l.b16 %v379
    %v927 = vunpack.c.h.b16 %v379
    %v928 = vunpack.c.l.b16 %v380
    %v929 = vunpack.c.h.b16 %v380
    %v930 = vunpack.c.l.b16 %v381
    %v931 = vunpack.c.h.b16 %v381
    %v932 = vunpack.c.l.b16 %v382
    %v933 = vunpack.c.h.b16 %v382
    %v934 = vunpack.c.l.b16 %v383
    %v935 = vunpack.c.h.b16 %v383
    %v936 = vunpack.c.l.b16 %v384
    %v937 = vunpack.c.h.b16 %v384
    %v938 = vunpack.c.l.b16 %v385
    %v939 = vunpack.c.h.b16 %v385
    %v940 = vunpack.c.l.b16 %v386
    %v941 = vunpack.c.h.b16 %v386
    %v942 = vunpack.c.l.b16 %v387
    %v943 = vunpack.c.h.b16 %v387
    %v944 = vunpack.c.l.b16 %v388
    %v945 = vunpack.c.h.b16 %v388
    %v946 = vunpack.c.l.b16 %v389
    %v947 = vunpack.c.h.b16 %v389
    %v948 = vunpack.c.l.b16 %v390
    %v949 = vunpack.c.h.b16 %v390
    %v950 = vunpack.c.l.b16 %v391
    %v951 = vunpack.c.h.b16 %v391
    %v952 = vunpack.c.l.b16 %v392
    %v953 = vunpack.c.h.b16 %v392
    %v954 = vunpack.c.l.b16 %v393
    %v955 = vunpack.c.h.b16 %v393
    %v956 = vunpack.c.l.b16 %v394
    %v957 = vunpack.c.h.b16 %v394
    %v958 = vunpack.c.l.b16 %v395
    %v959 = vunpack.c.h.b16 %v395
    %v960 = vunpack.c.l.b16 %v396
    %v961 = vunpack.c.h.b16 %v396
    %v962 = vunpack.c.l.b16 %v397
    %v963 = vunpack.c.h.b16 %v397
    %v964 = vunpack.c.l.b16 %v398
    %v965 = vunpack.c.h.b16 %v398
    %v966 = vunpack.c.l.b16 %v399
    %v967 = vunpack.c.h.b16 %v399
    %v968 = vunpack.c.l.b16 %v400
    %v969 = vunpack.c.h.b16 %v400
    %v970 = vunpack.c.l.b16 %v401
    %v971 = vunpack.c.h.b16 %v401
    %v972 = vunpack.c.l.b16 %v402
    %v973 = vunpack.c.h.b16 %v402
    %v974 = vunpack.c.l.b16 %v403
    %v975 = vunpack.c.h.b16 %v403
    %v976 = vunpack.c.l.b16 %v404
    %v977 = vunpack.c.h.b16 %v404
    %v978 = vunpack.c.l.b16 %v405
    %v979 = vunpack.c.h.b16 %v405
    %v980 = vunpack.c.l.b16 %v406
    %v981 = vunpack.c.h.b16 %v406
    %v982 = vunpack.c.l.b16 %v407
    %v983 = vunpack.c.h.b16 %v407
    %v984 = vunpack.c.l.b16 %v408
    %v985 = vunpack.c.h.b16 %v408
    %v986 = vunpack.c.l.b16 %v409
    %v987 = vunpack.c.h.b16 %v409
    %v988 = vunpack.c.l.b16 %v410
    %v989 = vunpack.c.h.b16 %v410
    %v990 = vunpack.c.l.b16 %v411
    %v991 = vunpack.c.h.b16 %v411
    %v992 = vunpack.c.l.b16 %v412
    %v993 = vunpack.c.h.b16 %v412
    %v994 = vunpack.c.l.b16 %v413
    %v995 = vunpack.c.h.b16 %v413
    %v996 = vunpack.c.l.b16 %v414
    %v997 = vunpack.c.h.b16 %v414
    %v998 = vunpack.c.l.b16 %v415
    %v999 = vunpack.c.h.b16 %v415
    %v1000 = vunpack.c.l.b16 %v416
    %v1001 = vunpack.c.h.b16 %v416
    %v1002 = vunpack.c.l.b16 %v417
    %v1003 = vunpack.c.h.b16 %v417
    %v1004 = vunpack.c.l.b16 %v418
    %v1005 = vunpack.c.h.b16 %v418
    %v1006 = vunpack.c.l.b16 %v419
    %v1007 = vunpack.c.h.b16 %v419
    %v1008 = vunpack.c.l.b16 %v420
    %v1009 = vunpack.c.h.b16 %v420
    %v1010 = vunpack.c.l.b16 %v421
    %v1011 = vunpack.c.h.b16 %v421
    %v1012 = vunpack.c.l.b16 %v422
    %v1013 = vunpack.c.h.b16 %v422
    %v1014 = vunpack.c.l.b16 %v423
    %v1015 = vunpack.c.h.b16 %v423
    %v1016 = vunpack.c.l.b16 %v424
    %v1017 = vunpack.c.h.b16 %v424
    %v1018 = vunpack.c.l.b16 %v425
    %v1019 = vunpack.c.h.b16 %v425
    %v1020 = vunpack.c.l.b16 %v426
    %v1021 = vunpack.c.h.b16 %v426
    %v1022 = vunpack.c.l.b16 %v427
    %v1023 = vunpack.c.h.b16 %v427
    %v1024 = vunpack.c.l.b16 %v428
    %v1025 = vunpack.c.h.b16 %v428
    %v1026 = vunpack.c.l.b16 %v429
    %v1027 = vunpack.c.h.b16 %v429
    %v1028 = vunpack.c.l.b16 %v430
    %v1029 = vunpack.c.h.b16 %v430
    %v1030 = vunpack.c.l.b16 %v431
    %v1031 = vunpack.c.h.b16 %v431
    %v1032 = vunpack.c.l.b16 %v432
    %v1033 = vunpack.c.h.b16 %v432
    %v1034 = vunpack.c.l.b16 %v433
    %v1035 = vunpack.c.h.b16 %v433
    %v1036 = vunpack.c.l.b16 %v434
    %v1037 = vunpack.c.h.b16 %v434
    %v1038 = vunpack.c.l.b16 %v435
    %v1039 = vunpack.c.h.b16 %v435
    %v1040 = vunpack.c.l.b16 %v436
    %v1041 = vunpack.c.h.b16 %v436
    %v1042 = vunpack.c.l.b16 %v437
    %v1043 = vunpack.c.h.b16 %v437
    %v1044 = vunpack.c.l.b16 %v438
    %v1045 = vunpack.c.h.b16 %v438
    %v1046 = vunpack.c.l.b16 %v439
    %v1047 = vunpack.c.h.b16 %v439
    %v1048 = vunpack.c.l.b16 %v440
    %v1049 = vunpack.c.h.b16 %v440
    %v1050 = vunpack.c.l.b16 %v441
    %v1051 = vunpack.c.h.b16 %v441
    %v1052 = vunpack.c.l.b16 %v442
    %v1053 = vunpack.c.h.b16 %v442
    %v1054 = vunpack.c.l.b16 %v443
    %v1055 = vunpack.c.h.b16 %v443
    %v1056 = vunpack.c.l.b16 %v444
    %v1057 = vunpack.c.h.b16 %v444
    %v1058 = vunpack.c.l.b16 %v445
    %v1059 = vunpack.c.h.b16 %v445
    %v1060 = vunpack.c.l.b16 %v446
    %v1061 = vunpack.c.h.b16 %v446
    %v1062 = vunpack.c.l.b16 %v447
    %v1063 = vunpack.c.h.b16 %v447
    %v1064 = vunpack.c.l.b16 %v448
    %v1065 = vunpack.c.h.b16 %v448
    %v1066 = vunpack.c.l.b16 %v449
    %v1067 = vunpack.c.h.b16 %v449
    %v1068 = vunpack.c.l.b16 %v450
    %v1069 = vunpack.c.h.b16 %v450
    %v1070 = vunpack.c.l.b16 %v451
    %v1071 = vunpack.c.h.b16 %v451
    %v1072 = vunpack.c.l.b16 %v452
    %v1073 = vunpack.c.h.b16 %v452
    %v1074 = vunpack.c.l.b16 %v453
    %v1075 = vunpack.c.h.b16 %v453
    %v1076 = vunpack.c.l.b16 %v454
    %v1077 = vunpack.c.h.b16 %v454
    %v1078 = vunpack.c.l.b16 %v455
    %v1079 = vunpack.c.h.b16 %v455
    %v1080 = vunpack.c.l.b16 %v456
    %v1081 = vunpack.c.h.b16 %v456
    %v1082 = vunpack.c.l.b16 %v457
    %v1083 = vunpack.c.h.b16 %v457
    %v1084 = vunpack.c.l.b16 %v458
    %v1085 = vunpack.c.h.b16 %v458
    %v1086 = vunpack.c.l.b16 %v459
    %v1087 = vunpack.c.h.b16 %v459
    %v1088 = vunpack.c.l.b16 %v460
    %v1089 = vunpack.c.h.b16 %v460
    %v1090 = vunpack.c.l.b16 %v461
    %v1091 = vunpack.c.h.b16 %v461
    %v1092 = vunpack.c.l.b16 %v462
    %v1093 = vunpack.c.h.b16 %v462
    %v1094 = vunpack.c.l.b16 %v463
    %v1095 = vunpack.c.h.b16 %v463
    %v1096 = vunpack.c.l.b16 %v464
    %v1097 = vunpack.c.h.b16 %v464
    %v1098 = vunpack.c.l.b16 %v465
    %v1099 = vunpack.c.h.b16 %v465
    %v1100 = vunpack.c.l.b16 %v466
    %v1101 = vunpack.c.h.b16 %v466
    %v1102 = vunpack.c.l.b16 %v467
    %v1103 = vunpack.c.h.b16 %v467
    %v1104 = vunpack.c.l.b16 %v468
    %v1105 = vunpack.c.h.b16 %v468
    %v1106 = vunpack.c.l.b16 %v469
    %v1107 = vunpack.c.h.b16 %v469
    %v1108 = vunpack.c.l.b16 %v470
    %v1109 = vunpack.c.h.b16 %v470
    %v1110 = vunpack.c.l.b16 %v471
    %v1111 = vunpack.c.h.b16 %v471
    %v1112 = vunpack.c.l.b16 %v472
    %v1113 = vunpack.c.h.b16 %v472
    %v1114 = vunpack.c.l.b16 %v473
    %v1115 = vunpack.c.h.b16 %v473
    %v1116 = vunpack.c.l.b16 %v474
    %v1117 = vunpack.c.h.b16 %v474
    %v1118 = vunpack.c.l.b16 %v475
    %v1119 = vunpack.c.h.b16 %v475
    %v1120 = vunpack.c.l.b16 %v476
    %v1121 = vunpack.c.h.b16 %v476
    %v1122 = vunpack.c.l.b16 %v477
    %v1123 = vunpack.c.h.b16 %v477
    %v1124 = vunpack.c.l.b16 %v478
    %v1125 = vunpack.c.h.b16 %v478
    %v1126 = vunpack.c.l.b16 %v479
    %v1127 = vunpack.c.h.b16 %v479
    %v1128 = vunpack.c.l.b16 %v480
    %v1129 = vunpack.c.h.b16 %v480
    %v1130 = vunpack.c.l.b16 %v481
    %v1131 = vunpack.c.h.b16 %v481
    %v1132 = vunpack.c.l.b16 %v482
    %v1133 = vunpack.c.h.b16 %v482
    %v1134 = vunpack.c.l.b16 %v483
    %v1135 = vunpack.c.h.b16 %v483
    %v1136 = vunpack.c.l.b16 %v484
    %v1137 = vunpack.c.h.b16 %v484
    %v1138 = vunpack.c.l.b16 %v485
    %v1139 = vunpack.c.h.b16 %v485
    %v1140 = vunpack.c.l.b16 %v486
    %v1141 = vunpack.c.h.b16 %v486
    %v1142 = vunpack.c.l.b16 %v487
    %v1143 = vunpack.c.h.b16 %v487
    %v1144 = vunpack.c.l.b16 %v488
    %v1145 = vunpack.c.h.b16 %v488
    %v1146 = vunpack.c.l.b16 %v489
    %v1147 = vunpack.c.h.b16 %v489
    %v1148 = vunpack.c.l.b16 %v490
    %v1149 = vunpack.c.h.b16 %v490
    %v1150 = vunpack.c.l.b16 %v491
    %v1151 = vunpack.c.h.b16 %v491
    %v1152 = vunpack.c.l.b16 %v492
    %v1153 = vunpack.c.h.b16 %v492
    %v1154 = vunpack.c.l.b16 %v493
    %v1155 = vunpack.c.h.b16 %v493
    %v1156 = vunpack.c.l.b16 %v494
    %v1157 = vunpack.c.h.b16 %v494
    %v1158 = vunpack.c.l.b16 %v495
    %v1159 = vunpack.c.h.b16 %v495
    %v1160 = vunpack.c.l.b16 %v496
    %v1161 = vunpack.c.h.b16 %v496
    %v1162 = vunpack.c.l.b16 %v497
    %v1163 = vunpack.c.h.b16 %v497
    %v1164 = vunpack.c.l.b16 %v498
    %v1165 = vunpack.c.h.b16 %v498
    %v1166 = vunpack.c.l.b16 %v499
    %v1167 = vunpack.c.h.b16 %v499
    %v1168 = vunpack.c.l.b16 %v500
    %v1169 = vunpack.c.h.b16 %v500
    %v1170 = vunpack.c.l.b16 %v501
    %v1171 = vunpack.c.h.b16 %v501
    %v1172 = vunpack.c.l.b16 %v502
    %v1173 = vunpack.c.h.b16 %v502
    %v1174 = vunpack.c.l.b16 %v503
    %v1175 = vunpack.c.h.b16 %v503
    %v1176 = vunpack.c.l.b16 %v504
    %v1177 = vunpack.c.h.b16 %v504
    %v1178 = vunpack.c.l.b16 %v505
    %v1179 = vunpack.c.h.b16 %v505
    %v1180 = vunpack.c.l.b16 %v506
    %v1181 = vunpack.c.h.b16 %v506
    %v1182 = vunpack.c.l.b16 %v507
    %v1183 = vunpack.c.h.b16 %v507
    %v1184 = vunpack.c.l.b16 %v508
    %v1185 = vunpack.c.h.b16 %v508
    %v1186 = vunpack.c.l.b16 %v509
    %v1187 = vunpack.c.h.b16 %v509
    %v1188 = vunpack.c.l.b16 %v510
    %v1189 = vunpack.c.h.b16 %v510
    %v1190 = vunpack.c.l.b16 %v511
    %v1191 = vunpack.c.h.b16 %v511
    %v1192 = vunpack.c.l.b16 %v512
    %v1193 = vunpack.c.h.b16 %v512
    %v1194 = vunpack.c.l.b16 %v513
    %v1195 = vunpack.c.h.b16 %v513
    %v1196 = vunpack.c.l.b16 %v514
    %v1197 = vunpack.c.h.b16 %v514
    %v1198 = vunpack.c.l.b16 %v515
    %v1199 = vunpack.c.h.b16 %v515
    %v1200 = vunpack.c.l.b16 %v516
    %v1201 = vunpack.c.h.b16 %v516
    %v1202 = vunpack.c.l.b16 %v517
    %v1203 = vunpack.c.h.b16 %v517
    %v1204 = vunpack.c.l.b16 %v518
    %v1205 = vunpack.c.h.b16 %v518
    %v1206 = vunpack.c.l.b16 %v519
    %v1207 = vunpack.c.h.b16 %v519
    %v1208 = vunpack.c.l.b16 %v520
    %v1209 = vunpack.c.h.b16 %v520
    %v1210 = vunpack.c.l.b16 %v521
    %v1211 = vunpack.c.h.b16 %v521
    %v1212 = vunpack.c.l.b16 %v522
    %v1213 = vunpack.c.h.b16 %v522
    %v1214 = vunpack.c.l.b16 %v523
    %v1215 = vunpack.c.h.b16 %v523
    %v1216 = vunpack.c.l.b16 %v524
    %v1217 = vunpack.c.h.b16 %v524
    %v1218 = vunpack.c.l.b16 %v525
    %v1219 = vunpack.c.h.b16 %v525
    %v1220 = vunpack.c.l.b16 %v526
    %v1221 = vunpack.c.h.b16 %v526
    %v1222 = vunpack.c.l.b16 %v527
    %v1223 = vunpack.c.h.b16 %v527
    %v1224 = vunpack.c.l.b16 %v528
    %v1225 = vunpack.c.h.b16 %v528
    %v1226 = vunpack.c.l.b16 %v529
    %v1227 = vunpack.c.h.b16 %v529
    %v1228 = vunpack.c.l.b16 %v530
    %v1229 = vunpack.c.h.b16 %v530
    %v1230 = vunpack.c.l.b16 %v531
    %v1231 = vunpack.c.h.b16 %v531
    %v1232 = vunpack.c.l.b16 %v532
    %v1233 = vunpack.c.h.b16 %v532
    %v1234 = vunpack.c.l.b16 %v533
    %v1235 = vunpack.c.h.b16 %v533
    %v1236 = vunpack.c.l.b16 %v534
    %v1237 = vunpack.c.h.b16 %v534
    %v1238 = vunpack.c.l.b16 %v535
    %v1239 = vunpack.c.h.b16 %v535
    %v1240 = vunpack.c.l.b16 %v536
    %v1241 = vunpack.c.h.b16 %v536
    %v1242 = vunpack.c.l.b16 %v537
    %v1243 = vunpack.c.h.b16 %v537
    %v1244 = vunpack.c.l.b16 %v538
    %v1245 = vunpack.c.h.b16 %v538
    %v1246 = vunpack.c.l.b16 %v539
    %v1247 = vunpack.c.h.b16 %v539
    %v1248 = vunpack.c.l.b16 %v540
    %v1249 = vunpack.c.h.b16 %v540
    %v1250 = vunpack.c.l.b16 %v541
    %v1251 = vunpack.c.h.b16 %v541
    %v1252 = vunpack.c.l.b16 %v542
    %v1253 = vunpack.c.h.b16 %v542
    %v1254 = vunpack.c.l.b16 %v543
    %v1255 = vunpack.c.h.b16 %v543
    %v1256 = vunpack.c.l.b16 %v544
    %v1257 = vunpack.c.h.b16 %v544
    %v1258 = vunpack.c.l.b16 %v545
    %v1259 = vunpack.c.h.b16 %v545
    %v1260 = vunpack.c.l.b16 %v546
    %v1261 = vunpack.c.h.b16 %v546
    %v1262 = vunpack.c.l.b16 %v547
    %v1263 = vunpack.c.h.b16 %v547
    %v1264 = vunpack.c.l.b16 %v548
    %v1265 = vunpack.c.h.b16 %v548
    %v1266 = vunpack.c.l.b16 %v549
    %v1267 = vunpack.c.h.b16 %v549
    %v1268 = vunpack.c.l.b16 %v550
    %v1269 = vunpack.c.h.b16 %v550
    %v1270 = vunpack.c.l.b16 %v551
    %v1271 = vunpack.c.h.b16 %v551
    %v1272 = vunpack.c.l.b16 %v552
    %v1273 = vunpack.c.h.b16 %v552
    %v1274 = vunpack.c.l.b16 %v553
    %v1275 = vunpack.c.h.b16 %v553
    %v1276 = vunpack.c.l.b16 %v554
    %v1277 = vunpack.c.h.b16 %v554
    %v1278 = vunpack.c.l.b16 %v555
    %v1279 = vunpack.c.h.b16 %v555
    %v1280 = vunpack.c.l.b16 %v556
    %v1281 = vunpack.c.h.b16 %v556
    %v1282 = vunpack.c.l.b16 %v557
    %v1283 = vunpack.c.h.b16 %v557
    %v1284 = vunpack.c.l.b16 %v558
    %v1285 = vunpack.c.h.b16 %v558
    %v1286 = vunpack.c.l.b16 %v559
    %v1287 = vunpack.c.h.b16 %v559
    %v1288 = vunpack.c.l.b16 %v560
    %v1289 = vunpack.c.h.b16 %v560
    %v1290 = vunpack.c.l.b16 %v561
    %v1291 = vunpack.c.h.b16 %v561
    %v1292 = vunpack.c.l.b16 %v562
    %v1293 = vunpack.c.h.b16 %v562
    %v1294 = vunpack.c.l.b16 %v563
    %v1295 = vunpack.c.h.b16 %v563
    %v1296 = vunpack.c.l.b16 %v564
    %v1297 = vunpack.c.h.b16 %v564
    %v1298 = vunpack.c.l.b16 %v565
    %v1299 = vunpack.c.h.b16 %v565
    %v1300 = vunpack.c.l.b16 %v566
    %v1301 = vunpack.c.h.b16 %v566
    %v1302 = vunpack.c.l.b16 %v567
    %v1303 = vunpack.c.h.b16 %v567
    %v1304 = vunpack.c.l.b16 %v568
    %v1305 = vunpack.c.h.b16 %v568
    %v1306 = vunpack.c.l.b16 %v569
    %v1307 = vunpack.c.h.b16 %v569
    %v1308 = vunpack.c.l.b16 %v570
    %v1309 = vunpack.c.h.b16 %v570
    %v1310 = vunpack.c.l.b16 %v571
    %v1311 = vunpack.c.h.b16 %v571
    %v1312 = vunpack.c.l.b16 %v572
    %v1313 = vunpack.c.h.b16 %v572
    %v1314 = vunpack.c.l.b16 %v573
    %v1315 = vunpack.c.h.b16 %v573
    %v1316 = vunpack.c.l.b16 %v574
    %v1317 = vunpack.c.h.b16 %v574
    %v1318 = vunpack.c.l.b16 %v575
    %v1319 = vunpack.c.h.b16 %v575
    %v1320 = vunpack.c.l.b16 %v576
    %v1321 = vunpack.c.h.b16 %v576
    %v1322 = vunpack.c.l.b16 %v577
    %v1323 = vunpack.c.h.b16 %v577
    %v1324 = vunpack.c.l.b16 %v578
    %v1325 = vunpack.c.h.b16 %v578
    %v1326 = vunpack.c.l.b16 %v579
    %v1327 = vunpack.c.h.b16 %v579
    %v1328 = vunpack.c.l.b16 %v580
    %v1329 = vunpack.c.h.b16 %v580
    %v1330 = vunpack.c.l.b16 %v581
    %v1331 = vunpack.c.h.b16 %v581
    %v1332 = vunpack.c.l.b16 %v582
    %v1333 = vunpack.c.h.b16 %v582
    %v1334 = vunpack.c.l.b16 %v583
    %v1335 = vunpack.c.h.b16 %v583
    %v1336 = vunpack.c.l.b16 %v584
    %v1337 = vunpack.c.h.b16 %v584
    %v1338 = vunpack.c.l.b16 %v585
    %v1339 = vunpack.c.h.b16 %v585
    %v1340 = vunpack.c.l.b16 %v586
    %v1341 = vunpack.c.h.b16 %v586
    %v1342 = vunpack.c.l.b16 %v587
    %v1343 = vunpack.c.h.b16 %v587
    %v1344 = vunpack.c.l.b16 %v588
    %v1345 = vunpack.c.h.b16 %v588
    %v1346 = vunpack.c.l.b16 %v589
    %v1347 = vunpack.c.h.b16 %v589
    %v1348 = vunpack.c.l.b16 %v590
    %v1349 = vunpack.c.h.b16 %v590
    %v1350 = vunpack.c.l.b16 %v591
    %v1351 = vunpack.c.h.b16 %v591
    %v1352 = vunpack.c.l.b16 %v592
    %v1353 = vunpack.c.h.b16 %v592
    %v1354 = vunpack.c.l.b16 %v593
    %v1355 = vunpack.c.h.b16 %v593
    %v1356 = vunpack.c.l.b16 %v594
    %v1357 = vunpack.c.h.b16 %v594
    %v1358 = vunpack.c.l.b16 %v595
    %v1359 = vunpack.c.h.b16 %v595
    %v1360 = vunpack.c.l.b16 %v596
    %v1361 = vunpack.c.h.b16 %v596
    %v1362 = vunpack.c.l.b16 %v597
    %v1363 = vunpack.c.h.b16 %v597
    %v1364 = vunpack.c.l.b16 %v598
    %v1365 = vunpack.c.h.b16 %v598
    %v1366 = vunpack.c.l.b16 %v599
    %v1367 = vunpack.c.h.b16 %v599
    %v1368 = vunpack.c.l.b16 %v600
    %v1369 = vunpack.c.h.b16 %v600
    %v1370 = vunpack.c.l.b16 %v601
    %v1371 = vunpack.c.h.b16 %v601
    %v1372 = vunpack.c.l.b16 %v602
    %v1373 = vunpack.c.h.b16 %v602
    %v1374 = vunpack.c.l.b16 %v603
    %v1375 = vunpack.c.h.b16 %v603
    %v1376 = vunpack.c.l.b16 %v604
    %v1377 = vunpack.c.h.b16 %v604
    %v1378 = vunpack.c.l.b16 %v605
    %v1379 = vunpack.c.h.b16 %v605
    %v1380 = vunpack.c.l.b16 %v606
    %v1381 = vunpack.c.h.b16 %v606
    %v1382 = vunpack.c.l.b16 %v607
    %v1383 = vunpack.c.h.b16 %v607
    %v1384 = vunpack.c.l.b16 %v608
    %v1385 = vunpack.c.h.b16 %v608
    %v1386 = vunpack.c.l.b16 %v609
    %v1387 = vunpack.c.h.b16 %v609
    %v1388 = vunpack.c.l.b16 %v610
    %v1389 = vunpack.c.h.b16 %v610
    %v1390 = vunpack.c.l.b16 %v611
    %v1391 = vunpack.c.h.b16 %v611
    %v1392 = vunpack.c.l.b16 %v612
    %v1393 = vunpack.c.h.b16 %v612
    %v1394 = vunpack.c.l.b16 %v613
    %v1395 = vunpack.c.h.b16 %v613
    %v1396 = vunpack.c.l.b16 %v614
    %v1397 = vunpack.c.h.b16 %v614
    %v1398 = vunpack.c.l.b16 %v615
    %v1399 = vunpack.c.h.b16 %v615
    %v1400 = vunpack.c.l.b16 %v616
    %v1401 = vunpack.c.h.b16 %v616
    %v1402 = vunpack.c.l.b16 %v617
    %v1403 = vunpack.c.h.b16 %v617
    %v1404 = vunpack.c.l.b16 %v618
    %v1405 = vunpack.c.h.b16 %v618
    %v1406 = vunpack.c.l.b16 %v619
    %v1407 = vunpack.c.h.b16 %v619
    %v1408 = vunpack.c.l.b16 %v620
    %v1409 = vunpack.c.h.b16 %v620
    %v1410 = vunpack.c.l.b16 %v621
    %v1411 = vunpack.c.h.b16 %v621
    %v1412 = vpack.c.b16 %v904, %v900
    %v1413 = vpack.c.b16 %v905, %v901
    %v1414 = vpack.c.b16 %v906, %v902
    %v1415 = vpack.c.b16 %v907, %v903
    %v1416 = vpack.c.b16 %v912, %v908
    %v1417 = vpack.c.b16 %v913, %v909
    %v1418 = vpack.c.b16 %v914, %v910
    %v1419 = vpack.c.b16 %v915, %v911
    %v1420 = vpack.c.b16 %v920, %v916
    %v1421 = vpack.c.b16 %v921, %v917
    %v1422 = vpack.c.b16 %v922, %v918
    %v1423 = vpack.c.b16 %v923, %v919
    %v1424 = vpack.c.b16 %v928, %v924
    %v1425 = vpack.c.b16 %v929, %v925
    %v1426 = vpack.c.b16 %v930, %v926
    %v1427 = vpack.c.b16 %v931, %v927
    %v1428 = vpack.c.b16 %v936, %v932
    %v1429 = vpack.c.b16 %v937, %v933
    %v1430 = vpack.c.b16 %v938, %v934
    %v1431 = vpack.c.b16 %v939, %v935
    %v1432 = vpack.c.b16 %v944, %v940
    %v1433 = vpack.c.b16 %v945, %v941
    %v1434 = vpack.c.b16 %v946, %v942
    %v1435 = vpack.c.b16 %v947, %v943
    %v1436 = vpack.c.b16 %v952, %v948
    %v1437 = vpack.c.b16 %v953, %v949
    %v1438 = vpack.c.b16 %v954, %v950
    %v1439 = vpack.c.b16 %v955, %v951
    %v1440 = vpack.c.b16 %v960, %v956
    %v1441 = vpack.c.b16 %v961, %v957
    %v1442 = vpack.c.b16 %v962, %v958
    %v1443 = vpack.c.b16 %v963, %v959
    %v1444 = vpack.c.b16 %v968, %v964
    %v1445 = vpack.c.b16 %v969, %v965
    %v1446 = vpack.c.b16 %v970, %v966
    %v1447 = vpack.c.b16 %v971, %v967
    %v1448 = vpack.c.b16 %v976, %v972
    %v1449 = vpack.c.b16 %v977, %v973
    %v1450 = vpack.c.b16 %v978, %v974
    %v1451 = vpack.c.b16 %v979, %v975
    %v1452 = vpack.c.b16 %v984, %v980
    %v1453 = vpack.c.b16 %v985, %v981
    %v1454 = vpack.c.b16 %v986, %v982
    %v1455 = vpack.c.b16 %v987, %v983
    %v1456 = vpack.c.b16 %v992, %v988
    %v1457 = vpack.c.b16 %v993, %v989
    %v1458 = vpack.c.b16 %v994, %v990
    %v1459 = vpack.c.b16 %v995, %v991
    %v1460 = vpack.c.b16 %v1000, %v996
    %v1461 = vpack.c.b16 %v1001, %v997
    %v1462 = vpack.c.b16 %v1002, %v998
    %v1463 = vpack.c.b16 %v1003, %v999
    %v1464 = vpack.c.b16 %v1008, %v1004
    %v1465 = vpack.c.b16 %v1009, %v1005
    %v1466 = vpack.c.b16 %v1010, %v1006
    %v1467 = vpack.c.b16 %v1011, %v1007
    %v1468 = vpack.c.b16 %v1016, %v1012
    %v1469 = vpack.c.b16 %v1017, %v1013
    %v1470 = vpack.c.b16 %v1018, %v1014
    %v1471 = vpack.c.b16 %v1019, %v1015
    %v1472 = vpack.c.b16 %v1024, %v1020
    %v1473 = vpack.c.b16 %v1025, %v1021
    %v1474 = vpack.c.b16 %v1026, %v1022
    %v1475 = vpack.c.b16 %v1027, %v1023
    %v1476 = vpack.c.b16 %v1032, %v1028
    %v1477 = vpack.c.b16 %v1033, %v1029
    %v1478 = vpack.c.b16 %v1034, %v1030
    %v1479 = vpack.c.b16 %v1035, %v1031
    %v1480 = vpack.c.b16 %v1040, %v1036
    %v1481 = vpack.c.b16 %v1041, %v1037
    %v1482 = vpack.c.b16 %v1042, %v1038
    %v1483 = vpack.c.b16 %v1043, %v1039
    %v1484 = vpack.c.b16 %v1048, %v1044
    %v1485 = vpack.c.b16 %v1049, %v1045
    %v1486 = vpack.c.b16 %v1050, %v1046
    %v1487 = vpack.c.b16 %v1051, %v1047
    %v1488 = vpack.c.b16 %v1056, %v1052
    %v1489 = vpack.c.b16 %v1057, %v1053
    %v1490 = vpack.c.b16 %v1058, %v1054
    %v1491 = vpack.c.b16 %v1059, %v1055
    %v1492 = vpack.c.b16 %v1064, %v1060
    %v1493 = vpack.c.b16 %v1065, %v1061
    %v1494 = vpack.c.b16 %v1066, %v1062
    %v1495 = vpack.c.b16 %v1067, %v1063
    %v1496 = vpack.c.b16 %v1072, %v1068
    %v1497 = vpack.c.b16 %v1073, %v1069
    %v1498 = vpack.c.b16 %v1074, %v1070
    %v1499 = vpack.c.b16 %v1075, %v1071
    %v1500 = vpack.c.b16 %v1080, %v1076
    %v1501 = vpack.c.b16 %v1081, %v1077
    %v1502 = vpack.c.b16 %v1082, %v1078
    %v1503 = vpack.c.b16 %v1083, %v1079
    %v1504 = vpack.c.b16 %v1088, %v1084
    %v1505 = vpack.c.b16 %v1089, %v1085
    %v1506 = vpack.c.b16 %v1090, %v1086
    %v1507 = vpack.c.b16 %v1091, %v1087
    %v1508 = vpack.c.b16 %v1096, %v1092
    %v1509 = vpack.c.b16 %v1097, %v1093
    %v1510 = vpack.c.b16 %v1098, %v1094
    %v1511 = vpack.c.b16 %v1099, %v1095
    %v1512 = vpack.c.b16 %v1104, %v1100
    %v1513 = vpack.c.b16 %v1105, %v1101
    %v1514 = vpack.c.b16 %v1106, %v1102
    %v1515 = vpack.c.b16 %v1107, %v1103
    %v1516 = vpack.c.b16 %v1112, %v1108
    %v1517 = vpack.c.b16 %v1113, %v1109
    %v1518 = vpack.c.b16 %v1114, %v1110
    %v1519 = vpack.c.b16 %v1115, %v1111
    %v1520 = vpack.c.b16 %v1120, %v1116
    %v1521 = vpack.c.b16 %v1121, %v1117
    %v1522 = vpack.c.b16 %v1122, %v1118
    %v1523 = vpack.c.b16 %v1123, %v1119
    %v1524 = vpack.c.b16 %v1128, %v1124
    %v1525 = vpack.c.b16 %v1129, %v1125
    %v1526 = vpack.c.b16 %v1130, %v1126
    %v1527 = vpack.c.b16 %v1131, %v1127
    %v1528 = vpack.c.b16 %v1136, %v1132
    %v1529 = vpack.c.b16 %v1137, %v1133
    %v1530 = vpack.c.b16 %v1138, %v1134
    %v1531 = vpack.c.b16 %v1139, %v1135
    %v1532 = vpack.c.b16 %v1144, %v1140
    %v1533 = vpack.c.b16 %v1145, %v1141
    %v1534 = vpack.c.b16 %v1146, %v1142
    %v1535 = vpack.c.b16 %v1147, %v1143
    %v1536 = vpack.c.b16 %v1152, %v1148
    %v1537 = vpack.c.b16 %v1153, %v1149
    %v1538 = vpack.c.b16 %v1154, %v1150
    %v1539 = vpack.c.b16 %v1155, %v1151
    %v1540 = vpack.c.b16 %v1160, %v1156
    %v1541 = vpack.c.b16 %v1161, %v1157
    %v1542 = vpack.c.b16 %v1162, %v1158
    %v1543 = vpack.c.b16 %v1163, %v1159
    %v1544 = vpack.c.b16 %v1168, %v1164
    %v1545 = vpack.c.b16 %v1169, %v1165
    %v1546 = vpack.c.b16 %v1170, %v1166
    %v1547 = vpack.c.b16 %v1171, %v1167
    %v1548 = vpack.c.b16 %v1176, %v1172
    %v1549 = vpack.c.b16 %v1177, %v1173
    %v1550 = vpack.c.b16 %v1178, %v1174
    %v1551 = vpack.c.b16 %v1179, %v1175
    %v1552 = vpack.c.b16 %v1184, %v1180
    %v1553 = vpack.c.b16 %v1185, %v1181
    %v1554 = vpack.c.b16 %v1186, %v1182
    %v1555 = vpack.c.b16 %v1187, %v1183
    %v1556 = vpack.c.b16 %v1192, %v1188
    %v1557 = vpack.c.b16 %v1193, %v1189
    %v1558 = vpack.c.b16 %v1194, %v1190
    %v1559 = vpack.c.b16 %v1195, %v1191
    %v1560 = vpack.c.b16 %v1200, %v1196
    %v1561 = vpack.c.b16 %v1201, %v1197
    %v1562 = vpack.c.b16 %v1202, %v1198
    %v1563 = vpack.c.b16 %v1203, %v1199
    %v1564 = vpack.c.b16 %v1208, %v1204
    %v1565 = vpack.c.b16 %v1209, %v1205
    %v1566 = vpack.c.b16 %v1210, %v1206
    %v1567 = vpack.c.b16 %v1211, %v1207
    %v1568 = vpack.c.b16 %v1216, %v1212
    %v1569 = vpack.c.b16 %v1217, %v1213
    %v1570 = vpack.c.b16 %v1218, %v1214
    %v1571 = vpack.c.b16 %v1219, %v1215
    %v1572 = vpack.c.b16 %v1224, %v1220
    %v1573 = vpack.c.b16 %v1225, %v1221
    %v1574 = vpack.c.b16 %v1226, %v1222
    %v1575 = vpack.c.b16 %v1227, %v1223
    %v1576 = vpack.c.b16 %v1232, %v1228
    %v1577 = vpack.c.b16 %v1233, %v1229
    %v1578 = vpack.c.b16 %v1234, %v1230
    %v1579 = vpack.c.b16 %v1235, %v1231
    %v1580 = vpack.c.b16 %v1240, %v1236
    %v1581 = vpack.c.b16 %v1241, %v1237
    %v1582 = vpack.c.b16 %v1242, %v1238
    %v1583 = vpack.c.b16 %v1243, %v1239
    %v1584 = vpack.c.b16 %v1248, %v1244
    %v1585 = vpack.c.b16 %v1249, %v1245
    %v1586 = vpack.c.b16 %v1250, %v1246
    %v1587 = vpack.c.b16 %v1251, %v1247
    %v1588 = vpack.c.b16 %v1256, %v1252
    %v1589 = vpack.c.b16 %v1257, %v1253
    %v1590 = vpack.c.b16 %v1258, %v1254
    %v1591 = vpack.c.b16 %v1259, %v1255
    %v1592 = vpack.c.b16 %v1264, %v1260
    %v1593 = vpack.c.b16 %v1265, %v1261
    %v1594 = vpack.c.b16 %v1266, %v1262
    %v1595 = vpack.c.b16 %v1267, %v1263
    %v1596 = vpack.c.b16 %v1272, %v1268
    %v1597 = vpack.c.b16 %v1273, %v1269
    %v1598 = vpack.c.b16 %v1274, %v1270
    %v1599 = vpack.c.b16 %v1275, %v1271
    %v1600 = vpack.c.b16 %v1280, %v1276
    %v1601 = vpack.c.b16 %v1281, %v1277
    %v1602 = vpack.c.b16 %v1282, %v1278
    %v1603 = vpack.c.b16 %v1283, %v1279
    %v1604 = vpack.c.b16 %v1288, %v1284
    %v1605 = vpack.c.b16 %v1289, %v1285
    %v1606 = vpack.c.b16 %v1290, %v1286
    %v1607 = vpack.c.b16 %v1291, %v1287
    %v1608 = vpack.c.b16 %v1296, %v1292
    %v1609 = vpack.c.b16 %v1297, %v1293
    %v1610 = vpack.c.b16 %v1298, %v1294
    %v1611 = vpack.c.b16 %v1299, %v1295
    %v1612 = vpack.c.b16 %v1304, %v1300
    %v1613 = vpack.c.b16 %v1305, %v1301
    %v1614 = vpack.c.b16 %v1306, %v1302
    %v1615 = vpack.c.b16 %v1307, %v1303
    %v1616 = vpack.c.b16 %v1312, %v1308
    %v1617 = vpack.c.b16 %v1313, %v1309
    %v1618 = vpack.c.b16 %v1314, %v1310
    %v1619 = vpack.c.b16 %v1315, %v1311
    %v1620 = vpack.c.b16 %v1320, %v1316
    %v1621 = vpack.c.b16 %v1321, %v1317
    %v1622 = vpack.c.b16 %v1322, %v1318
    %v1623 = vpack.c.b16 %v1323, %v1319
    %v1624 = vpack.c.b16 %v1328, %v1324
    %v1625 = vpack.c.b16 %v1329, %v1325
    %v1626 = vpack.c.b16 %v1330, %v1326
    %v1627 = vpack.c.b16 %v1331, %v1327
    %v1628 = vpack.c.b16 %v1336, %v1332
    %v1629 = vpack.c.b16 %v1337, %v1333
    %v1630 = vpack.c.b16 %v1338, %v1334
    %v1631 = vpack.c.b16 %v1339, %v1335
    %v1632 = vpack.c.b16 %v1344, %v1340
    %v1633 = vpack.c.b16 %v1345, %v1341
    %v1634 = vpack.c.b16 %v1346, %v1342
    %v1635 = vpack.c.b16 %v1347, %v1343
    %v1636 = vpack.c.b16 %v1352, %v1348
    %v1637 = vpack.c.b16 %v1353, %v1349
    %v1638 = vpack.c.b16 %v1354, %v1350
    %v1639 = vpack.c.b16 %v1355, %v1351
    %v1640 = vpack.c.b16 %v1360, %v1356
    %v1641 = vpack.c.b16 %v1361, %v1357
    %v1642 = vpack.c.b16 %v1362, %v1358
    %v1643 = vpack.c.b16 %v1363, %v1359
    %v1644 = vpack.c.b16 %v1368, %v1364
    %v1645 = vpack.c.b16 %v1369, %v1365
    %v1646 = vpack.c.b16 %v1370, %v1366
    %v1647 = vpack.c.b16 %v1371, %v1367
    %v1648 = vpack.c.b16 %v1376, %v1372
    %v1649 = vpack.c.b16 %v1377, %v1373
    %v1650 = vpack.c.b16 %v1378, %v1374
    %v1651 = vpack.c.b16 %v1379, %v1375
    %v1652 = vpack.c.b16 %v1384, %v1380
    %v1653 = vpack.c.b16 %v1385, %v1381
    %v1654 = vpack.c.b16 %v1386, %v1382
    %v1655 = vpack.c.b16 %v1387, %v1383
    %v1656 = vpack.c.b16 %v1392, %v1388
    %v1657 = vpack.c.b16 %v1393, %v1389
    %v1658 = vpack.c.b16 %v1394, %v1390
    %v1659 = vpack.c.b16 %v1395, %v1391
    %v1660 = vpack.c.b16 %v1400, %v1396
    %v1661 = vpack.c.b16 %v1401, %v1397
    %v1662 = vpack.c.b16 %v1402, %v1398
    %v1663 = vpack.c.b16 %v1403, %v1399
    %v1664 = vpack.c.b16 %v1408, %v1404
    %v1665 = vpack.c.b16 %v1409, %v1405
    %v1666 = vpack.c.b16 %v1410, %v1406
    %v1667 = vpack.c.b16 %v1411, %v1407
    %1924 = vmatprep.subr.bf16.mxu0 %v1413
    %1925 = vmatpush1.bf16.msra.mxu0 %v1412
    %1926 = vmatprep.subr.bf16.mxu0 %v1417
    %1927 = vmatpush1.bf16.msra.mxu0 %v1416
    %1928 = vmatprep.subr.bf16.mxu0 %v1421
    %1929 = vmatpush1.bf16.msra.mxu0 %v1420
    %1930 = vmatprep.subr.bf16.mxu0 %v1425
    %1931 = vmatpush1.bf16.msra.mxu0 %v1424
    %1932 = vmatprep.subr.bf16.mxu0 %v1429
    %1933 = vmatpush1.bf16.msra.mxu0 %v1428
    %1934 = vmatprep.subr.bf16.mxu0 %v1433
    %1935 = vmatpush1.bf16.msra.mxu0 %v1432
    %1936 = vmatprep.subr.bf16.mxu0 %v1437
    %1937 = vmatpush1.bf16.msra.mxu0 %v1436
    %1938 = vmatprep.subr.bf16.mxu0 %v1441
    %1939 = vmatpush1.bf16.msra.mxu0 %v1440
    %1940 = vmatprep.subr.bf16.mxu0 %v1445
    %1941 = vmatpush1.bf16.msra.mxu0 %v1444
    %1942 = vmatprep.subr.bf16.mxu0 %v1449
    %1943 = vmatpush1.bf16.msra.mxu0 %v1448
    %1944 = vmatprep.subr.bf16.mxu0 %v1453
    %1945 = vmatpush1.bf16.msra.mxu0 %v1452
    %1946 = vmatprep.subr.bf16.mxu0 %v1457
    %1947 = vmatpush1.bf16.msra.mxu0 %v1456
    %1948 = vmatprep.subr.bf16.mxu0 %v1461
    %1949 = vmatpush1.bf16.msra.mxu0 %v1460
    %1950 = vmatprep.subr.bf16.mxu0 %v1465
    %1951 = vmatpush1.bf16.msra.mxu0 %v1464
    %1952 = vmatprep.subr.bf16.mxu0 %v1469
    %1953 = vmatpush1.bf16.msra.mxu0 %v1468
    %1954 = vmatprep.subr.bf16.mxu0 %v1473
    %1955 = vmatpush1.bf16.msra.mxu0 %v1472
    %1956 = vmatprep.mubr.bf16.mxu0 %v359
    %1957 = vmatmul.mubr.bf16.gmra.mrb[0].mxu0 %v358
    %v1958 = vpop.f32.mrb[0].mxu0
    %v1959 = vadd.f32 %v627, %v1958
    %v1960 = vpop.f32.mrb[0].mxu0
    %v1961 = vadd.f32 %v631, %v1960
    %v1962 = vpop.f32.mrb[0].mxu0
    %v1963 = vpop.f32.mrb[0].mxu0
    %1964 = vdwg.mxu0
    %1965 = vmatprep.subr.bf16.mxu0 %v1477
    %1966 = vmatpush1.bf16.msra.mxu0 %v1476
    %1967 = vmatprep.subr.bf16.mxu0 %v1481
    %1968 = vmatpush1.bf16.msra.mxu0 %v1480
    %1969 = vmatprep.subr.bf16.mxu0 %v1485
    %1970 = vmatpush1.bf16.msra.mxu0 %v1484
    %1971 = vmatprep.subr.bf16.mxu0 %v1489
    %1972 = vmatpush1.bf16.msra.mxu0 %v1488
    %1973 = vmatprep.subr.bf16.mxu0 %v1493
    %1974 = vmatpush1.bf16.msra.mxu0 %v1492
    %1975 = vmatprep.subr.bf16.mxu0 %v1497
    %1976 = vmatpush1.bf16.msra.mxu0 %v1496
    %1977 = vmatprep.subr.bf16.mxu0 %v1501
    %1978 = vmatpush1.bf16.msra.mxu0 %v1500
    %1979 = vmatprep.subr.bf16.mxu0 %v1505
    %1980 = vmatpush1.bf16.msra.mxu0 %v1504
    %1981 = vmatprep.subr.bf16.mxu0 %v1509
    %1982 = vmatpush1.bf16.msra.mxu0 %v1508
    %1983 = vmatprep.subr.bf16.mxu0 %v1513
    %1984 = vmatpush1.bf16.msra.mxu0 %v1512
    %1985 = vmatprep.subr.bf16.mxu0 %v1517
    %1986 = vmatpush1.bf16.msra.mxu0 %v1516
    %1987 = vmatprep.subr.bf16.mxu0 %v1521
    %1988 = vmatpush1.bf16.msra.mxu0 %v1520
    %1989 = vmatprep.subr.bf16.mxu0 %v1525
    %1990 = vmatpush1.bf16.msra.mxu0 %v1524
    %1991 = vmatprep.subr.bf16.mxu0 %v1529
    %1992 = vmatpush1.bf16.msra.mxu0 %v1528
    %1993 = vmatprep.subr.bf16.mxu0 %v1533
    %1994 = vmatpush1.bf16.msra.mxu0 %v1532
    %1995 = vmatprep.subr.bf16.mxu0 %v1537
    %1996 = vmatpush1.bf16.msra.mxu0 %v1536
    %1997 = vmatprep.mubr.bf16.mxu0 %v361
    %1998 = vmatmul.mubr.bf16.gmra.mrb[0].mxu0 %v360
    %v1999 = vpop.f32.mrb[0].mxu0
    %v2000 = vadd.f32 %v1959, %v1999
    %v2001 = vpop.f32.mrb[0].mxu0
    %v2002 = vadd.f32 %v1961, %v2001
    %v2003 = vpop.f32.mrb[0].mxu0
    %v2004 = vpop.f32.mrb[0].mxu0
    %2005 = vdwg.mxu0
    %2006 = vmatprep.subr.bf16.mxu0 %v1541
    %2007 = vmatpush1.bf16.msra.mxu0 %v1540
    %2008 = vmatprep.subr.bf16.mxu0 %v1545
    %2009 = vmatpush1.bf16.msra.mxu0 %v1544
    %2010 = vmatprep.subr.bf16.mxu0 %v1549
    %2011 = vmatpush1.bf16.msra.mxu0 %v1548
    %2012 = vmatprep.subr.bf16.mxu0 %v1553
    %2013 = vmatpush1.bf16.msra.mxu0 %v1552
    %2014 = vmatprep.subr.bf16.mxu0 %v1557
    %2015 = vmatpush1.bf16.msra.mxu0 %v1556
    %2016 = vmatprep.subr.bf16.mxu0 %v1561
    %2017 = vmatpush1.bf16.msra.mxu0 %v1560
    %2018 = vmatprep.subr.bf16.mxu0 %v1565
    %2019 = vmatpush1.bf16.msra.mxu0 %v1564
    %2020 = vmatprep.subr.bf16.mxu0 %v1569
    %2021 = vmatpush1.bf16.msra.mxu0 %v1568
    %2022 = vmatprep.subr.bf16.mxu0 %v1573
    %2023 = vmatpush1.bf16.msra.mxu0 %v1572
    %2024 = vmatprep.subr.bf16.mxu0 %v1577
    %2025 = vmatpush1.bf16.msra.mxu0 %v1576
    %2026 = vmatprep.subr.bf16.mxu0 %v1581
    %2027 = vmatpush1.bf16.msra.mxu0 %v1580
    %2028 = vmatprep.subr.bf16.mxu0 %v1585
    %2029 = vmatpush1.bf16.msra.mxu0 %v1584
    %2030 = vmatprep.subr.bf16.mxu0 %v1589
    %2031 = vmatpush1.bf16.msra.mxu0 %v1588
    %2032 = vmatprep.subr.bf16.mxu0 %v1593
    %2033 = vmatpush1.bf16.msra.mxu0 %v1592
    %2034 = vmatprep.subr.bf16.mxu0 %v1597
    %2035 = vmatpush1.bf16.msra.mxu0 %v1596
    %2036 = vmatprep.subr.bf16.mxu0 %v1601
    %2037 = vmatpush1.bf16.msra.mxu0 %v1600
    %2038 = vmatprep.mubr.bf16.mxu0 %v363
    %2039 = vmatmul.mubr.bf16.gmra.mrb[0].mxu0 %v362
    %v2040 = vpop.f32.mrb[0].mxu0
    %v2041 = vadd.f32 %v2000, %v2040
    %v2042 = vpop.f32.mrb[0].mxu0
    %v2043 = vadd.f32 %v2002, %v2042
    %v2044 = vpop.f32.mrb[0].mxu0
    %v2045 = vpop.f32.mrb[0].mxu0
    %2046 = vdwg.mxu0
    %2047 = vmatprep.subr.bf16.mxu0 %v1605
    %2048 = vmatpush1.bf16.msra.mxu0 %v1604
    %2049 = vmatprep.subr.bf16.mxu0 %v1609
    %2050 = vmatpush1.bf16.msra.mxu0 %v1608
    %2051 = vmatprep.subr.bf16.mxu0 %v1613
    %2052 = vmatpush1.bf16.msra.mxu0 %v1612
    %2053 = vmatprep.subr.bf16.mxu0 %v1617
    %2054 = vmatpush1.bf16.msra.mxu0 %v1616
    %2055 = vmatprep.subr.bf16.mxu0 %v1621
    %2056 = vmatpush1.bf16.msra.mxu0 %v1620
    %2057 = vmatprep.subr.bf16.mxu0 %v1625
    %2058 = vmatpush1.bf16.msra.mxu0 %v1624
    %2059 = vmatprep.subr.bf16.mxu0 %v1629
    %2060 = vmatpush1.bf16.msra.mxu0 %v1628
    %2061 = vmatprep.subr.bf16.mxu0 %v1633
    %2062 = vmatpush1.bf16.msra.mxu0 %v1632
    %2063 = vmatprep.subr.bf16.mxu0 %v1637
    %2064 = vmatpush1.bf16.msra.mxu0 %v1636
    %2065 = vmatprep.subr.bf16.mxu0 %v1641
    %2066 = vmatpush1.bf16.msra.mxu0 %v1640
    %2067 = vmatprep.subr.bf16.mxu0 %v1645
    %2068 = vmatpush1.bf16.msra.mxu0 %v1644
    %2069 = vmatprep.subr.bf16.mxu0 %v1649
    %2070 = vmatpush1.bf16.msra.mxu0 %v1648
    %2071 = vmatprep.subr.bf16.mxu0 %v1653
    %2072 = vmatpush1.bf16.msra.mxu0 %v1652
    %2073 = vmatprep.subr.bf16.mxu0 %v1657
    %2074 = vmatpush1.bf16.msra.mxu0 %v1656
    %2075 = vmatprep.subr.bf16.mxu0 %v1661
    %2076 = vmatpush1.bf16.msra.mxu0 %v1660
    %2077 = vmatprep.subr.bf16.mxu0 %v1665
    %2078 = vmatpush1.bf16.msra.mxu0 %v1664
    %2079 = vmatprep.mubr.bf16.mxu0 %v365
    %2080 = vmatmul.mubr.bf16.gmra.mrb[0].mxu0 %v364
    %v2081 = vpop.f32.mrb[0].mxu0
    %v2082 = vadd.f32 %v2041, %v2081
    %v2083 = vpop.f32.mrb[0].mxu0
    %v2084 = vadd.f32 %v2043, %v2083
    %v2085 = vpop.f32.mrb[0].mxu0
    %v2086 = vpop.f32.mrb[0].mxu0
    %2087 = vdwg.mxu0
    %2088 = vmatprep.subr.bf16.mxu0 %v1415
    %2089 = vmatpush1.bf16.msra.mxu0 %v1414
    %2090 = vmatprep.subr.bf16.mxu0 %v1419
    %2091 = vmatpush1.bf16.msra.mxu0 %v1418
    %2092 = vmatprep.subr.bf16.mxu0 %v1423
    %2093 = vmatpush1.bf16.msra.mxu0 %v1422
    %2094 = vmatprep.subr.bf16.mxu0 %v1427
    %2095 = vmatpush1.bf16.msra.mxu0 %v1426
    %2096 = vmatprep.subr.bf16.mxu0 %v1431
    %2097 = vmatpush1.bf16.msra.mxu0 %v1430
    %2098 = vmatprep.subr.bf16.mxu0 %v1435
    %2099 = vmatpush1.bf16.msra.mxu0 %v1434
    %2100 = vmatprep.subr.bf16.mxu0 %v1439
    %2101 = vmatpush1.bf16.msra.mxu0 %v1438
    %2102 = vmatprep.subr.bf16.mxu0 %v1443
    %2103 = vmatpush1.bf16.msra.mxu0 %v1442
    %2104 = vmatprep.subr.bf16.mxu0 %v1447
    %2105 = vmatpush1.bf16.msra.mxu0 %v1446
    %2106 = vmatprep.subr.bf16.mxu0 %v1451
    %2107 = vmatpush1.bf16.msra.mxu0 %v1450
    %2108 = vmatprep.subr.bf16.mxu0 %v1455
    %2109 = vmatpush1.bf16.msra.mxu0 %v1454
    %2110 = vmatprep.subr.bf16.mxu0 %v1459
    %2111 = vmatpush1.bf16.msra.mxu0 %v1458
    %2112 = vmatprep.subr.bf16.mxu0 %v1463
    %2113 = vmatpush1.bf16.msra.mxu0 %v1462
    %2114 = vmatprep.subr.bf16.mxu0 %v1467
    %2115 = vmatpush1.bf16.msra.mxu0 %v1466
    %2116 = vmatprep.subr.bf16.mxu0 %v1471
    %2117 = vmatpush1.bf16.msra.mxu0 %v1470
    %2118 = vmatprep.subr.bf16.mxu0 %v1475
    %2119 = vmatpush1.bf16.msra.mxu0 %v1474
    %2120 = vmatprep.mubr.bf16.mxu0 %v359
    %2121 = vmatmul.mubr.bf16.gmra.mrb[0].mxu0 %v358
    %v2122 = vpop.f32.mrb[0].mxu0
    %v2123 = vadd.f32 %v635, %v2122
    %v2124 = vpop.f32.mrb[0].mxu0
    %v2125 = vadd.f32 %v639, %v2124
    %v2126 = vpop.f32.mrb[0].mxu0
    %v2127 = vpop.f32.mrb[0].mxu0
    %2128 = vdwg.mxu0
    %2129 = vmatprep.subr.bf16.mxu0 %v1479
    %2130 = vmatpush1.bf16.msra.mxu0 %v1478
    %2131 = vmatprep.subr.bf16.mxu0 %v1483
    %2132 = vmatpush1.bf16.msra.mxu0 %v1482
    %2133 = vmatprep.subr.bf16.mxu0 %v1487
    %2134 = vmatpush1.bf16.msra.mxu0 %v1486
    %2135 = vmatprep.subr.bf16.mxu0 %v1491
    %2136 = vmatpush1.bf16.msra.mxu0 %v1490
    %2137 = vmatprep.subr.bf16.mxu0 %v1495
    %2138 = vmatpush1.bf16.msra.mxu0 %v1494
    %2139 = vmatprep.subr.bf16.mxu0 %v1499
    %2140 = vmatpush1.bf16.msra.mxu0 %v1498
    %2141 = vmatprep.subr.bf16.mxu0 %v1503
    %2142 = vmatpush1.bf16.msra.mxu0 %v1502
    %2143 = vmatprep.subr.bf16.mxu0 %v1507
    %2144 = vmatpush1.bf16.msra.mxu0 %v1506
    %2145 = vmatprep.subr.bf16.mxu0 %v1511
    %2146 = vmatpush1.bf16.msra.mxu0 %v1510
    %2147 = vmatprep.subr.bf16.mxu0 %v1515
    %2148 = vmatpush1.bf16.msra.mxu0 %v1514
    %2149 = vmatprep.subr.bf16.mxu0 %v1519
    %2150 = vmatpush1.bf16.msra.mxu0 %v1518
    %2151 = vmatprep.subr.bf16.mxu0 %v1523
    %2152 = vmatpush1.bf16.msra.mxu0 %v1522
    %2153 = vmatprep.subr.bf16.mxu0 %v1527
    %2154 = vmatpush1.bf16.msra.mxu0 %v1526
    %2155 = vmatprep.subr.bf16.mxu0 %v1531
    %2156 = vmatpush1.bf16.msra.mxu0 %v1530
    %2157 = vmatprep.subr.bf16.mxu0 %v1535
    %2158 = vmatpush1.bf16.msra.mxu0 %v1534
    %2159 = vmatprep.subr.bf16.mxu0 %v1539
    %2160 = vmatpush1.bf16.msra.mxu0 %v1538
    %2161 = vmatprep.mubr.bf16.mxu0 %v361
    %2162 = vmatmul.mubr.bf16.gmra.mrb[0].mxu0 %v360
    %v2163 = vpop.f32.mrb[0].mxu0
    %v2164 = vadd.f32 %v2123, %v2163
    %v2165 = vpop.f32.mrb[0].mxu0
    %v2166 = vadd.f32 %v2125, %v2165
    %v2167 = vpop.f32.mrb[0].mxu0
    %v2168 = vpop.f32.mrb[0].mxu0
    %2169 = vdwg.mxu0
    %2170 = vmatprep.subr.bf16.mxu0 %v1543
    %2171 = vmatpush1.bf16.msra.mxu0 %v1542
    %2172 = vmatprep.subr.bf16.mxu0 %v1547
    %2173 = vmatpush1.bf16.msra.mxu0 %v1546
    %2174 = vmatprep.subr.bf16.mxu0 %v1551
    %2175 = vmatpush1.bf16.msra.mxu0 %v1550
    %2176 = vmatprep.subr.bf16.mxu0 %v1555
    %2177 = vmatpush1.bf16.msra.mxu0 %v1554
    %2178 = vmatprep.subr.bf16.mxu0 %v1559
    %2179 = vmatpush1.bf16.msra.mxu0 %v1558
    %2180 = vmatprep.subr.bf16.mxu0 %v1563
    %2181 = vmatpush1.bf16.msra.mxu0 %v1562
    %2182 = vmatprep.subr.bf16.mxu0 %v1567
    %2183 = vmatpush1.bf16.msra.mxu0 %v1566
    %2184 = vmatprep.subr.bf16.mxu0 %v1571
    %2185 = vmatpush1.bf16.msra.mxu0 %v1570
    %2186 = vmatprep.subr.bf16.mxu0 %v1575
    %2187 = vmatpush1.bf16.msra.mxu0 %v1574
    %2188 = vmatprep.subr.bf16.mxu0 %v1579
    %2189 = vmatpush1.bf16.msra.mxu0 %v1578
    %2190 = vmatprep.subr.bf16.mxu0 %v1583
    %2191 = vmatpush1.bf16.msra.mxu0 %v1582
    %2192 = vmatprep.subr.bf16.mxu0 %v1587
    %2193 = vmatpush1.bf16.msra.mxu0 %v1586
    %2194 = vmatprep.subr.bf16.mxu0 %v1591
    %2195 = vmatpush1.bf16.msra.mxu0 %v1590
    %2196 = vmatprep.subr.bf16.mxu0 %v1595
    %2197 = vmatpush1.bf16.msra.mxu0 %v1594
    %2198 = vmatprep.subr.bf16.mxu0 %v1599
    %2199 = vmatpush1.bf16.msra.mxu0 %v1598
    %2200 = vmatprep.subr.bf16.mxu0 %v1603
    %2201 = vmatpush1.bf16.msra.mxu0 %v1602
    %2202 = vmatprep.mubr.bf16.mxu0 %v363
    %2203 = vmatmul.mubr.bf16.gmra.mrb[0].mxu0 %v362
    %v2204 = vpop.f32.mrb[0].mxu0
    %v2205 = vadd.f32 %v2164, %v2204
    %v2206 = vpop.f32.mrb[0].mxu0
    %v2207 = vadd.f32 %v2166, %v2206
    %v2208 = vpop.f32.mrb[0].mxu0
    %v2209 = vpop.f32.mrb[0].mxu0
    %2210 = vdwg.mxu0
    %2211 = vmatprep.subr.bf16.mxu0 %v1607
    %2212 = vmatpush1.bf16.msra.mxu0 %v1606
    %2213 = vmatprep.subr.bf16.mxu0 %v1611
    %2214 = vmatpush1.bf16.msra.mxu0 %v1610
    %2215 = vmatprep.subr.bf16.mxu0 %v1615
    %2216 = vmatpush1.bf16.msra.mxu0 %v1614
    %2217 = vmatprep.subr.bf16.mxu0 %v1619
    %2218 = vmatpush1.bf16.msra.mxu0 %v1618
    %2219 = vmatprep.subr.bf16.mxu0 %v1623
    %2220 = vmatpush1.bf16.msra.mxu0 %v1622
    %2221 = vmatprep.subr.bf16.mxu0 %v1627
    %2222 = vmatpush1.bf16.msra.mxu0 %v1626
    %2223 = vmatprep.subr.bf16.mxu0 %v1631
    %2224 = vmatpush1.bf16.msra.mxu0 %v1630
    %2225 = vmatprep.subr.bf16.mxu0 %v1635
    %2226 = vmatpush1.bf16.msra.mxu0 %v1634
    %2227 = vmatprep.subr.bf16.mxu0 %v1639
    %2228 = vmatpush1.bf16.msra.mxu0 %v1638
    %2229 = vmatprep.subr.bf16.mxu0 %v1643
    %2230 = vmatpush1.bf16.msra.mxu0 %v1642
    %2231 = vmatprep.subr.bf16.mxu0 %v1647
    %2232 = vmatpush1.bf16.msra.mxu0 %v1646
    %2233 = vmatprep.subr.bf16.mxu0 %v1651
    %2234 = vmatpush1.bf16.msra.mxu0 %v1650
    %2235 = vmatprep.subr.bf16.mxu0 %v1655
    %2236 = vmatpush1.bf16.msra.mxu0 %v1654
    %2237 = vmatprep.subr.bf16.mxu0 %v1659
    %2238 = vmatpush1.bf16.msra.mxu0 %v1658
    %2239 = vmatprep.subr.bf16.mxu0 %v1663
    %2240 = vmatpush1.bf16.msra.mxu0 %v1662
    %2241 = vmatprep.subr.bf16.mxu0 %v1667
    %2242 = vmatpush1.bf16.msra.mxu0 %v1666
    %2243 = vmatprep.mubr.bf16.mxu0 %v365
    %2244 = vmatmul.mubr.bf16.gmra.mrb[0].mxu0 %v364
    %v2245 = vpop.f32.mrb[0].mxu0
    %v2246 = vadd.f32 %v2205, %v2245
    %v2247 = vpop.f32.mrb[0].mxu0
    %v2248 = vadd.f32 %v2207, %v2247
    %v2249 = vpop.f32.mrb[0].mxu0
    %v2250 = vpop.f32.mrb[0].mxu0
    %2251 = vdwg.mxu0
    %v2252 = vmax.f32 %v2082, 0.0
    %v2253 = vmax.f32 %v2084, 0.0
    %v2254 = vmax.f32 %v2246, 0.0
    %v2255 = vmax.f32 %v2248, 0.0
    %v2256 = vpack.c.bf16 %v2252, %v2252
    %v2257 = vpack.c.bf16 %v2253, %v2253
    %v2258 = vpack.c.bf16 %v2254, %v2254
    %v2259 = vpack.c.bf16 %v2255, %v2255
    %v2260 = vld [vmem:[%s5] sm:$0xf]
    %v2261 = vld [vmem:[%s5 + $0x4] sm:$0xf]
    %v2262 = vld [vmem:[%s5 + $0x8] sm:$0xf]
    %v2263 = vld [vmem:[%s5 + $0xc] sm:$0xf]
    %v2264 = vld [vmem:[%s5 + $0x10] sm:$0xf]
    %v2265 = vld [vmem:[%s5 + $0x14] sm:$0xf]
    %v2266 = vld [vmem:[%s5 + $0x18] sm:$0xf]
    %v2267 = vld [vmem:[%s5 + $0x1c] sm:$0xf]
    %v2268 = vld [vmem:[%s5 + $0x20] sm:$0xf]
    %v2269 = vld [vmem:[%s5 + $0x24] sm:$0xf]
    %v2270 = vld [vmem:[%s5 + $0x28] sm:$0xf]
    %v2271 = vld [vmem:[%s5 + $0x2c] sm:$0xf]
    %v2272 = vld [vmem:[%s5 + $0x30] sm:$0xf]
    %v2273 = vld [vmem:[%s5 + $0x34] sm:$0xf]
    %v2274 = vld [vmem:[%s5 + $0x38] sm:$0xf]
    %v2275 = vld [vmem:[%s5 + $0x3c] sm:$0xf]
    %v2276 = vld [vmem:[%s5 + $0x40] sm:$0xf]
    %v2277 = vld [vmem:[%s5 + $0x44] sm:$0xf]
    %v2278 = vld [vmem:[%s5 + $0x48] sm:$0xf]
    %v2279 = vld [vmem:[%s5 + $0x4c] sm:$0xf]
    %v2280 = vld [vmem:[%s5 + $0x50] sm:$0xf]
    %v2281 = vld [vmem:[%s5 + $0x54] sm:$0xf]
    %v2282 = vld [vmem:[%s5 + $0x58] sm:$0xf]
    %v2283 = vld [vmem:[%s5 + $0x5c] sm:$0xf]
    %v2284 = vld [vmem:[%s5 + $0x60] sm:$0xf]
    %v2285 = vld [vmem:[%s5 + $0x64] sm:$0xf]
    %v2286 = vld [vmem:[%s5 + $0x68] sm:$0xf]
    %v2287 = vld [vmem:[%s5 + $0x6c] sm:$0xf]
    %v2288 = vld [vmem:[%s5 + $0x70] sm:$0xf]
    %v2289 = vld [vmem:[%s5 + $0x74] sm:$0xf]
    %v2290 = vld [vmem:[%s5 + $0x78] sm:$0xf]
    %v2291 = vld [vmem:[%s5 + $0x7c] sm:$0xf]
    %v2292 = vld [vmem:[%s5 + $0x80] sm:$0xf]
    %v2293 = vld [vmem:[%s5 + $0x84] sm:$0xf]
    %v2294 = vld [vmem:[%s5 + $0x88] sm:$0xf]
    %v2295 = vld [vmem:[%s5 + $0x8c] sm:$0xf]
    %v2296 = vld [vmem:[%s5 + $0x90] sm:$0xf]
    %v2297 = vld [vmem:[%s5 + $0x94] sm:$0xf]
    %v2298 = vld [vmem:[%s5 + $0x98] sm:$0xf]
    %v2299 = vld [vmem:[%s5 + $0x9c] sm:$0xf]
    %v2300 = vld [vmem:[%s5 + $0xa0] sm:$0xf]
    %v2301 = vld [vmem:[%s5 + $0xa4] sm:$0xf]
    %v2302 = vld [vmem:[%s5 + $0xa8] sm:$0xf]
    %v2303 = vld [vmem:[%s5 + $0xac] sm:$0xf]
    %v2304 = vld [vmem:[%s5 + $0xb0] sm:$0xf]
    %v2305 = vld [vmem:[%s5 + $0xb4] sm:$0xf]
    %v2306 = vld [vmem:[%s5 + $0xb8] sm:$0xf]
    %v2307 = vld [vmem:[%s5 + $0xbc] sm:$0xf]
    %v2308 = vld [vmem:[%s5 + $0xc0] sm:$0xf]
    %v2309 = vld [vmem:[%s5 + $0xc4] sm:$0xf]
    %v2310 = vld [vmem:[%s5 + $0xc8] sm:$0xf]
    %v2311 = vld [vmem:[%s5 + $0xcc] sm:$0xf]
    %v2312 = vld [vmem:[%s5 + $0xd0] sm:$0xf]
    %v2313 = vld [vmem:[%s5 + $0xd4] sm:$0xf]
    %v2314 = vld [vmem:[%s5 + $0xd8] sm:$0xf]
    %v2315 = vld [vmem:[%s5 + $0xdc] sm:$0xf]
    %v2316 = vld [vmem:[%s5 + $0xe0] sm:$0xf]
    %v2317 = vld [vmem:[%s5 + $0xe4] sm:$0xf]
    %v2318 = vld [vmem:[%s5 + $0xe8] sm:$0xf]
    %v2319 = vld [vmem:[%s5 + $0xec] sm:$0xf]
    %v2320 = vld [vmem:[%s5 + $0xf0] sm:$0xf]
    %v2321 = vld [vmem:[%s5 + $0xf4] sm:$0xf]
    %v2322 = vld [vmem:[%s5 + $0xf8] sm:$0xf]
    %v2323 = vld [vmem:[%s5 + $0xfc] sm:$0xf]
    %v2324 = vld [vmem:[%s6] sm:$0x1]
    %v2326 = vlaneseq
    %v2327 = vshrl.u32 %v2326, 7
    %v2328 = vsub.s32 0, %v2327
    %v2329 = vrot.slane %v2324, %v2328
    %v2395 = vunpack.c.l.b16 %v2260
    %v2396 = vunpack.c.l.b16 %v2261
    %v2397 = vunpack.c.l.b16 %v2262
    %v2398 = vunpack.c.l.b16 %v2263
    %v2399 = vunpack.c.l.b16 %v2264
    %v2400 = vunpack.c.l.b16 %v2265
    %v2401 = vunpack.c.l.b16 %v2266
    %v2402 = vunpack.c.l.b16 %v2267
    %v2403 = vunpack.c.l.b16 %v2268
    %v2404 = vunpack.c.l.b16 %v2269
    %v2405 = vunpack.c.l.b16 %v2270
    %v2406 = vunpack.c.l.b16 %v2271
    %v2407 = vunpack.c.l.b16 %v2272
    %v2408 = vunpack.c.l.b16 %v2273
    %v2409 = vunpack.c.l.b16 %v2274
    %v2410 = vunpack.c.l.b16 %v2275
    %v2411 = vunpack.c.l.b16 %v2276
    %v2412 = vunpack.c.l.b16 %v2277
    %v2413 = vunpack.c.l.b16 %v2278
    %v2414 = vunpack.c.l.b16 %v2279
    %v2415 = vunpack.c.l.b16 %v2280
    %v2416 = vunpack.c.l.b16 %v2281
    %v2417 = vunpack.c.l.b16 %v2282
    %v2418 = vunpack.c.l.b16 %v2283
    %v2419 = vunpack.c.l.b16 %v2284
    %v2420 = vunpack.c.l.b16 %v2285
    %v2421 = vunpack.c.l.b16 %v2286
    %v2422 = vunpack.c.l.b16 %v2287
    %v2423 = vunpack.c.l.b16 %v2288
    %v2424 = vunpack.c.l.b16 %v2289
    %v2425 = vunpack.c.l.b16 %v2290
    %v2426 = vunpack.c.l.b16 %v2291
    %v2427 = vunpack.c.l.b16 %v2292
    %v2428 = vunpack.c.l.b16 %v2293
    %v2429 = vunpack.c.l.b16 %v2294
    %v2430 = vunpack.c.l.b16 %v2295
    %v2431 = vunpack.c.l.b16 %v2296
    %v2432 = vunpack.c.l.b16 %v2297
    %v2433 = vunpack.c.l.b16 %v2298
    %v2434 = vunpack.c.l.b16 %v2299
    %v2435 = vunpack.c.l.b16 %v2300
    %v2436 = vunpack.c.l.b16 %v2301
    %v2437 = vunpack.c.l.b16 %v2302
    %v2438 = vunpack.c.l.b16 %v2303
    %v2439 = vunpack.c.l.b16 %v2304
    %v2440 = vunpack.c.l.b16 %v2305
    %v2441 = vunpack.c.l.b16 %v2306
    %v2442 = vunpack.c.l.b16 %v2307
    %v2443 = vunpack.c.l.b16 %v2308
    %v2444 = vunpack.c.l.b16 %v2309
    %v2445 = vunpack.c.l.b16 %v2310
    %v2446 = vunpack.c.l.b16 %v2311
    %v2447 = vunpack.c.l.b16 %v2312
    %v2448 = vunpack.c.l.b16 %v2313
    %v2449 = vunpack.c.l.b16 %v2314
    %v2450 = vunpack.c.l.b16 %v2315
    %v2451 = vunpack.c.l.b16 %v2316
    %v2452 = vunpack.c.l.b16 %v2317
    %v2453 = vunpack.c.l.b16 %v2318
    %v2454 = vunpack.c.l.b16 %v2319
    %v2455 = vunpack.c.l.b16 %v2320
    %v2456 = vunpack.c.l.b16 %v2321
    %v2457 = vunpack.c.l.b16 %v2322
    %v2458 = vunpack.c.l.b16 %v2323
    %v2459 = vpack.c.b16 %v2396, %v2395
    %v2460 = vpack.c.b16 %v2398, %v2397
    %v2461 = vpack.c.b16 %v2400, %v2399
    %v2462 = vpack.c.b16 %v2402, %v2401
    %v2463 = vpack.c.b16 %v2404, %v2403
    %v2464 = vpack.c.b16 %v2406, %v2405
    %v2465 = vpack.c.b16 %v2408, %v2407
    %v2466 = vpack.c.b16 %v2410, %v2409
    %v2467 = vpack.c.b16 %v2412, %v2411
    %v2468 = vpack.c.b16 %v2414, %v2413
    %v2469 = vpack.c.b16 %v2416, %v2415
    %v2470 = vpack.c.b16 %v2418, %v2417
    %v2471 = vpack.c.b16 %v2420, %v2419
    %v2472 = vpack.c.b16 %v2422, %v2421
    %v2473 = vpack.c.b16 %v2424, %v2423
    %v2474 = vpack.c.b16 %v2426, %v2425
    %v2475 = vpack.c.b16 %v2428, %v2427
    %v2476 = vpack.c.b16 %v2430, %v2429
    %v2477 = vpack.c.b16 %v2432, %v2431
    %v2478 = vpack.c.b16 %v2434, %v2433
    %v2479 = vpack.c.b16 %v2436, %v2435
    %v2480 = vpack.c.b16 %v2438, %v2437
    %v2481 = vpack.c.b16 %v2440, %v2439
    %v2482 = vpack.c.b16 %v2442, %v2441
    %v2483 = vpack.c.b16 %v2444, %v2443
    %v2484 = vpack.c.b16 %v2446, %v2445
    %v2485 = vpack.c.b16 %v2448, %v2447
    %v2486 = vpack.c.b16 %v2450, %v2449
    %v2487 = vpack.c.b16 %v2452, %v2451
    %v2488 = vpack.c.b16 %v2454, %v2453
    %v2489 = vpack.c.b16 %v2456, %v2455
    %v2490 = vpack.c.b16 %v2458, %v2457
    %2523 = vmatprep.subr.bf16.mxu0 0
    %2524 = vmatpush1.bf16.msra.mxu0 %v2459
    %2525 = vmatprep.subr.bf16.mxu0 0
    %2526 = vmatpush1.bf16.msra.mxu0 %v2460
    %2527 = vmatprep.subr.bf16.mxu0 0
    %2528 = vmatpush1.bf16.msra.mxu0 %v2461
    %2529 = vmatprep.subr.bf16.mxu0 0
    %2530 = vmatpush1.bf16.msra.mxu0 %v2462
    %2531 = vmatprep.subr.bf16.mxu0 0
    %2532 = vmatpush1.bf16.msra.mxu0 %v2463
    %2533 = vmatprep.subr.bf16.mxu0 0
    %2534 = vmatpush1.bf16.msra.mxu0 %v2464
    %2535 = vmatprep.subr.bf16.mxu0 0
    %2536 = vmatpush1.bf16.msra.mxu0 %v2465
    %2537 = vmatprep.subr.bf16.mxu0 0
    %2538 = vmatpush1.bf16.msra.mxu0 %v2466
    %2539 = vmatprep.subr.bf16.mxu0 0
    %2540 = vmatpush1.bf16.msra.mxu0 %v2467
    %2541 = vmatprep.subr.bf16.mxu0 0
    %2542 = vmatpush1.bf16.msra.mxu0 %v2468
    %2543 = vmatprep.subr.bf16.mxu0 0
    %2544 = vmatpush1.bf16.msra.mxu0 %v2469
    %2545 = vmatprep.subr.bf16.mxu0 0
    %2546 = vmatpush1.bf16.msra.mxu0 %v2470
    %2547 = vmatprep.subr.bf16.mxu0 0
    %2548 = vmatpush1.bf16.msra.mxu0 %v2471
    %2549 = vmatprep.subr.bf16.mxu0 0
    %2550 = vmatpush1.bf16.msra.mxu0 %v2472
    %2551 = vmatprep.subr.bf16.mxu0 0
    %2552 = vmatpush1.bf16.msra.mxu0 %v2473
    %2553 = vmatprep.subr.bf16.mxu0 0
    %2554 = vmatpush1.bf16.msra.mxu0 %v2474
    %2555 = vmatprep.mubr.bf16.mxu0 %v2257
    %2556 = vmatmul.mubr.bf16.gmra.mrb[0].mxu0 %v2256
    %v2557 = vpop.f32.mrb[0].mxu0
    %v2558 = vadd.f32 %v2329, %v2557
    %v2559 = vpop.f32.mrb[0].mxu0
    %v2560 = vpop.f32.mrb[0].mxu0
    %v2561 = vpop.f32.mrb[0].mxu0
    %2562 = vdwg.mxu0
    %2563 = vmatprep.subr.bf16.mxu0 0
    %2564 = vmatpush1.bf16.msra.mxu0 %v2475
    %2565 = vmatprep.subr.bf16.mxu0 0
    %2566 = vmatpush1.bf16.msra.mxu0 %v2476
    %2567 = vmatprep.subr.bf16.mxu0 0
    %2568 = vmatpush1.bf16.msra.mxu0 %v2477
    %2569 = vmatprep.subr.bf16.mxu0 0
    %2570 = vmatpush1.bf16.msra.mxu0 %v2478
    %2571 = vmatprep.subr.bf16.mxu0 0
    %2572 = vmatpush1.bf16.msra.mxu0 %v2479
    %2573 = vmatprep.subr.bf16.mxu0 0
    %2574 = vmatpush1.bf16.msra.mxu0 %v2480
    %2575 = vmatprep.subr.bf16.mxu0 0
    %2576 = vmatpush1.bf16.msra.mxu0 %v2481
    %2577 = vmatprep.subr.bf16.mxu0 0
    %2578 = vmatpush1.bf16.msra.mxu0 %v2482
    %2579 = vmatprep.subr.bf16.mxu0 0
    %2580 = vmatpush1.bf16.msra.mxu0 %v2483
    %2581 = vmatprep.subr.bf16.mxu0 0
    %2582 = vmatpush1.bf16.msra.mxu0 %v2484
    %2583 = vmatprep.subr.bf16.mxu0 0
    %2584 = vmatpush1.bf16.msra.mxu0 %v2485
    %2585 = vmatprep.subr.bf16.mxu0 0
    %2586 = vmatpush1.bf16.msra.mxu0 %v2486
    %2587 = vmatprep.subr.bf16.mxu0 0
    %2588 = vmatpush1.bf16.msra.mxu0 %v2487
    %2589 = vmatprep.subr.bf16.mxu0 0
    %2590 = vmatpush1.bf16.msra.mxu0 %v2488
    %2591 = vmatprep.subr.bf16.mxu0 0
    %2592 = vmatpush1.bf16.msra.mxu0 %v2489
    %2593 = vmatprep.subr.bf16.mxu0 0
    %2594 = vmatpush1.bf16.msra.mxu0 %v2490
    %2595 = vmatprep.mubr.bf16.mxu0 %v2259
    %2596 = vmatmul.mubr.bf16.gmra.mrb[0].mxu0 %v2258
    %v2597 = vpop.f32.mrb[0].mxu0
    %v2598 = vadd.f32 %v2558, %v2597
    %v2599 = vpop.f32.mrb[0].mxu0
    %v2600 = vpop.f32.mrb[0].mxu0
    %v2601 = vpop.f32.mrb[0].mxu0
    %2602 = vdwg.mxu0
    %v2603 = vtanh.pop %v2598
    %vm2604 = vcmask 31744
    %2605 = vst.msk [vmem:[%s7] sm:$0xff] %vm2604, %v2603
    // Predicated region
    $region34: #{actor_forward.1} parent=1 // pred_check
      _
    $region35: #{actor_forward.1} parent=1 // pred_check_branch
      %2607 = sbr.rel (0) target = $region37
    $region36: #{actor_forward.1} parent=1 // pred_region
      _
    $region37: #{actor_forward.1} parent=1 // pred_fallthru
      _
    // Predicated region
    $region38: #{actor_forward.1} parent=1 // pred_check
      _
    $region39: #{actor_forward.1} parent=1 // pred_check_branch
      %2609 = sbr.rel (0) target = $region41
    $region40: #{actor_forward.1} parent=1 // pred_region
      _
    $region41: #{actor_forward.1} parent=1 // pred_fallthru
      _
    %2610 = vsyncpa [#allocation3], 1

</llo_original>
